<compile_context>
chip_gen: v6e
topology: v6e:2x2x1
jax: 0.10.0
libtpu: 0.0.40
codegen_flags: <defaults>
</compile_context>

<pallas_src>
import jax
import jax.numpy as jnp
from jax import lax
from jax.experimental import pallas as pl
from jax.experimental.pallas import tpu as pltpu


def _round_up(n, m):
    return ((n + m - 1) // m) * m


def _spec(block_shape, index_map, n_buf=None):
    """BlockSpec helper; requests N-deep pipelining when the API supports it."""
    if n_buf is not None and hasattr(pl, "Buffered"):
        try:
            return pl.BlockSpec(block_shape, index_map,
                                pipeline_mode=pl.Buffered(n_buf))
        except TypeError:
            pass
    return pl.BlockSpec(block_shape, index_map)


# ---------------------------------------------------------------------------
# Prologue kernel: pointwise Conv1d (k=1) == dense matmul over channels,
# followed by L2-normalization over the embedding dim.  Runs once per input,
# so the main kernel streams normalized embeddings instead of recomputing
# them once per opposing tile.
# ---------------------------------------------------------------------------
def _embed_norm_kernel(t_ref, w_ref, b_ref, o_ref):
    B, tL, C = t_ref.shape
    E = w_ref.shape[1]
    t2 = t_ref[...].reshape(B * tL, C)
    e = jnp.dot(t2, w_ref[...], preferred_element_type=jnp.float32)
    e = e + b_ref[...]                                    # (B*tL, E) + (1, E)
    # F.normalize: x / max(||x||, 1e-12) == x * rsqrt(max(||x||^2, 1e-24))
    ssq = jnp.sum(e * e, axis=-1, keepdims=True)
    n = e * lax.rsqrt(jnp.maximum(ssq, 1e-24))            # EUP rsqrt
    o_ref[...] = n.reshape(B, tL, E).astype(o_ref.dtype)


def _embed_normalize(t, w, b, tile_l, out_dtype, vmem_limit):
    B, Lp, Cp = t.shape
    Ep = w.shape[1]
    return pl.pallas_call(
        _embed_norm_kernel,
        grid=(Lp // tile_l,),
        in_specs=[
            pl.BlockSpec((B, tile_l, Cp), lambda i: (0, i, 0)),   # X or Y tile
            pl.BlockSpec((Cp, Ep), lambda i: (0, 0)),             # weight
            pl.BlockSpec((1, Ep), lambda i: (0, 0)),              # bias
        ],
        out_shape=jax.ShapeDtypeStruct((B, Lp, Ep), out_dtype),
        out_specs=pl.BlockSpec((B, tile_l, Ep), lambda i: (0, i, 0)),
        compiler_params=pltpu.CompilerParams(
            dimension_semantics=("parallel",),
            vmem_limit_bytes=vmem_limit),
    )(t, w, b)


# ---------------------------------------------------------------------------
# Main kernel: one (i, j) tile of the similarity matrix, exact per-(i,j)
# training-mode BatchNorm statistics over the full batch (batch dim never
# tiled), and per-tile weighted-sum partials for both margin outputs.
# ---------------------------------------------------------------------------
def _pairwise_kernel(xn_ref, yn_ref, gamma_ref, beta_ref, wmx_ref, wmy_ref,
                     xpot_ref, ypot_ref):
    B, tLx, _ = xn_ref.shape
    _, tLy, _ = yn_ref.shape

    # Cosine-similarity tile (B, tLx, tLy): batched (tLx,E) x (tLy,E)^T on MXU
    # in its native layout (contract last dims, batch dim 0), f32 accumulate.
    s = lax.dot_general(xn_ref[...], yn_ref[...],
                        dimension_numbers=(((2,), (2,)), ((0,), (0,))),
                        preferred_element_type=jnp.float32)

    # BatchNorm1d over the batch dim (training mode, biased var, eps=1e-5).
    # Two-pass stats for numerical robustness.
    inv_b = 1.0 / B
    mu = jnp.sum(s, axis=0, keepdims=True) * inv_b
    d = s - mu
    var = jnp.sum(d * d, axis=0, keepdims=True) * inv_b
    inv_std = lax.rsqrt(var + 1e-5)                       # EUP rsqrt
    gamma = gamma_ref[...].astype(jnp.float32)
    beta = beta_ref[...].astype(jnp.float32)
    sn = d * (gamma * inv_std) + beta

    # margin_X partial: weighted sum over this j tile -> (B, tLx)
    wmx = wmx_ref[...].astype(jnp.float32).reshape(1, 1, tLy)
    xpot_ref[...] = jnp.sum(sn * wmx, axis=2).reshape(1, B, tLx)

    # margin_Y partial: weighted sum over this i tile -> (B, tLy)
    wmy = wmy_ref[...].astype(jnp.float32).reshape(1, tLx, 1)
    ypot_ref[...] = jnp.sum(sn * wmy, axis=1).reshape(1, B, tLy)


def _device_defaults():
    """(tile_lx, tile_ly, vmem_limit_bytes) tuned per TPU generation."""
    try:
        kind = jax.devices()[0].device_kind.lower()
    except Exception:
        kind = ""
    if "v7" in kind:
        # 64 MiB physical VMEM per TC: keep the lane dim 256, shrink sublanes.
        return 128, 256, 48 * 1024 * 1024
    if "v6" in kind:
        # 2x256x256 MXU + 128 MiB VMEM: bigger tiles amortize per-step cost.
        return 256, 256, 96 * 1024 * 1024
    # v5e / unknown: 128-tiles already fill the 128x128 MXU; mem-bound regime.
    return 128, 128, 32 * 1024 * 1024


def pairwise_forward(X, Y, params, *, tile_lx=None, tile_ly=None,
                     matmul_dtype=jnp.bfloat16):
    """Pairwise forward. matmul_dtype=bf16 is the MXU/HBM fast path (BN math
    and accumulation stay f32); pass jnp.float32 for exact f32."""
    B, Lx, Cx = X.shape
    _, Ly, Cy = Y.shape
    E = params['wx'].shape[1]

    d_tlx, d_tly, vmem_limit = _device_defaults()
    tile_lx = d_tlx if tile_lx is None else tile_lx
    tile_ly = d_tly if tile_ly is None else tile_ly
    assert tile_lx % 128 == 0 and tile_ly % 128 == 0
    tile_lx = min(tile_lx, _round_up(Lx, 128))
    tile_ly = min(tile_ly, _round_up(Ly, 128))

    Lxp, Lyp = _round_up(Lx, tile_lx), _round_up(Ly, tile_ly)
    Cxp, Cyp, Ep = _round_up(Cx, 128), _round_up(Cy, 128), _round_up(E, 128)
    nI, nJ = Lxp // tile_lx, Lyp // tile_ly

    def pad2(a, r, c):
        return jnp.pad(a, ((0, r - a.shape[0]), (0, c - a.shape[1])))

    # Zero padding is semantics-preserving: padded channels contribute 0 to
    # the embeds; padded i/j positions produce garbage similarities, but
    # gamma/beta/wmx/wmy are zero there, so they never reach real outputs
    # (BatchNorm is per-(i,j) feature, so padded features never mix either).
    Xp = jnp.pad(X, ((0, 0), (0, Lxp - Lx), (0, Cxp - Cx))).astype(matmul_dtype)
    Yp = jnp.pad(Y, ((0, 0), (0, Lyp - Ly), (0, Cyp - Cy))).astype(matmul_dtype)
    wx = pad2(params['wx'], Cxp, Ep).astype(matmul_dtype)
    wy = pad2(params['wy'], Cyp, Ep).astype(matmul_dtype)
    bx = pad2(params['bx'], 1, Ep).astype(jnp.float32)
    by = pad2(params['by'], 1, Ep).astype(jnp.float32)
    # gamma/beta dominate per-step HBM traffic at small B: stream them in the
    # matmul dtype (bf16 by default) and upcast inside the kernel.
    gamma = pad2(params['gamma'], Lxp, Lyp).astype(matmul_dtype)
    beta = pad2(params['beta'], Lxp, Lyp).astype(matmul_dtype)
    wmx = pad2(params['wmx'], 1, Lyp).astype(jnp.float32)
    wmy = pad2(params['wmy'], 1, Lxp).astype(jnp.float32)

    # ---- Prologue: embed + L2-normalize once per input (hoisted out of the
    # (i, j) loop so the Y embed is not recomputed nI times).
    Xn = _embed_normalize(Xp, wx, bx, tile_lx, matmul_dtype, vmem_limit)
    Yn = _embed_normalize(Yp, wy, by, tile_ly, matmul_dtype, vmem_limit)

    # ---- Main 2-D grid: similarity tile + BatchNorm + both margin partials.
    xpot_parts, ypot_parts = pl.pallas_call(
        _pairwise_kernel,
        grid=(nI, nJ),
        in_specs=[
            pl.BlockSpec((B, tile_lx, Ep), lambda i, j: (0, i, 0)),     # Xn
            _spec((B, tile_ly, Ep), lambda i, j: (0, j, 0), n_buf=3),   # Yn
            _spec((tile_lx, tile_ly), lambda i, j: (i, j), n_buf=3),    # gamma
            _spec((tile_lx, tile_ly), lambda i, j: (i, j), n_buf=3),    # beta
            pl.BlockSpec((1, tile_ly), lambda i, j: (0, j)),            # wmx
            pl.BlockSpec((1, tile_lx), lambda i, j: (0, i)),            # wmy
        ],
        out_shape=(jax.ShapeDtypeStruct((nJ, B, Lxp), jnp.float32),
                   jax.ShapeDtypeStruct((nI, B, Lyp), jnp.float32)),
        out_specs=(
            pl.BlockSpec((1, B, tile_lx), lambda i, j: (j, 0, i)),      # xpot partials
            pl.BlockSpec((1, B, tile_ly), lambda i, j: (i, 0, j)),      # ypot partials
        ),
        compiler_params=pltpu.CompilerParams(
            dimension_semantics=("parallel", "parallel"),
            vmem_limit_bytes=vmem_limit),
    )(Xn, Yn, gamma, beta, wmx, wmy)

    x_poten = xpot_parts.sum(axis=0)[:, :Lx] + params['bmx'][0]
    y_poten = ypot_parts.sum(axis=0)[:, :Ly] + params['bmy'][0]
    return x_poten, y_poten


def init_params(key, Cx, Cy, Lx, Ly):
    E = max(Cx, Cy)
    ks = jax.random.split(key, 8)
    return dict(
        # embed_X: Conv1d(Cx, E, 1) weight stored transposed as (Cx, E)
        wx=0.1 * jax.random.normal(ks[0], (Cx, E), jnp.float32),
        bx=0.1 * jax.random.normal(ks[1], (1, E), jnp.float32),
        # embed_Y: Conv1d(Cy, E, 1)
        wy=0.1 * jax.random.normal(ks[2], (Cy, E), jnp.float32),
        by=0.1 * jax.random.normal(ks[3], (1, E), jnp.float32),
        # normalize_S: BatchNorm1d(Lx*Ly) affine params (default init 1 / 0)
        gamma=jnp.ones((Lx, Ly), jnp.float32),
        beta=jnp.zeros((Lx, Ly), jnp.float32),
        # margin_X: Conv1d(Ly, 1, 1); margin_Y: Conv1d(Lx, 1, 1) (row vectors)
        wmx=0.1 * jax.random.normal(ks[4], (1, Ly), jnp.float32),
        wmy=0.1 * jax.random.normal(ks[5], (1, Lx), jnp.float32),
        bmx=0.1 * jax.random.normal(ks[6], (1,), jnp.float32),
        bmy=0.1 * jax.random.normal(ks[7], (1,), jnp.float32),
    )


def reference_forward(X, Y, p):
    """Plain-JAX (f32) mirror of the PyTorch forward for validation."""
    Xe = jnp.einsum('blc,ce->ble', X, p['wx']) + p['bx']
    Ye = jnp.einsum('blc,ce->ble', Y, p['wy']) + p['by']

    def l2norm(t):
        return t / jnp.maximum(jnp.linalg.norm(t, axis=-1, keepdims=True), 1e-12)

    S = jnp.einsum('bie,bje->bij', l2norm(Xe), l2norm(Ye))
    mu = jnp.mean(S, axis=0, keepdims=True)
    var = jnp.mean((S - mu) ** 2, axis=0, keepdims=True)
    S = p['gamma'] * (S - mu) / jnp.sqrt(var + 1e-5) + p['beta']
    xp = jnp.einsum('bij,j->bi', S, p['wmx'][0]) + p['bmx'][0]
    yp = jnp.einsum('bij,i->bj', S, p['wmy'][0]) + p['bmy'][0]
    return xp, yp


if __name__ == "__main__":
    # batch, x_spatial, y_spatial, x_channels, y_channels
    B, Lx, Ly, Cx, Cy = 8, 16, 8, 32, 32
    key = jax.random.PRNGKey(0)
    kx, ky, kp = jax.random.split(key, 3)
    X = jax.random.normal(kx, (B, Lx, Cx), jnp.float32)
    Y = jax.random.normal(ky, (B, Ly, Cy), jnp.float32)
    params = init_params(kp, Cx, Cy, Lx, Ly)

    # 1) exact-semantics check in full f32
    x_f32, y_f32 = pairwise_forward(X, Y, params, matmul_dtype=jnp.float32)
    jax.block_until_ready((x_f32, y_f32))
    x_ref, y_ref = reference_forward(X, Y, params)
    assert x_f32.shape == (B, Lx) and y_f32.shape == (B, Ly)
    assert jnp.allclose(x_f32, x_ref, atol=3e-2, rtol=3e-2), \
        float(jnp.max(jnp.abs(x_f32 - x_ref)))
    assert jnp.allclose(y_f32, y_ref, atol=3e-2, rtol=3e-2), \
        float(jnp.max(jnp.abs(y_f32 - y_ref)))

    # 2) performance default: bf16 MXU / streaming operands (f32 accumulate,
    #    f32 BatchNorm math)
    x_bf, y_bf = pairwise_forward(X, Y, params)
    jax.block_until_ready((x_bf, y_bf))
    assert x_bf.shape == (B, Lx) and y_bf.shape == (B, Ly)
    assert bool(jnp.all(jnp.isfinite(x_bf))) and bool(jnp.all(jnp.isfinite(y_bf)))

    print("KERNEL_OK")
</pallas_src>

<mosaic_0001>
module attributes {stable_mosaic.version = 11 : i64} {
  func.func @_embed_norm_kernel(%arg0: i32, %arg1: memref<8x128x128xf32, #tpu.memory_space<vmem>>, %arg2: memref<128x128xf32, #tpu.memory_space<vmem>>, %arg3: memref<1x128xf32, #tpu.memory_space<vmem>>, %arg4: memref<8x128x128xf32, #tpu.memory_space<vmem>>) attributes {dimension_semantics = [#tpu.dimension_semantics<parallel>], iteration_bounds = array<i64: 1>, scalar_prefetch = 0 : i64, scratch_operands = 0 : i64, tpu.core_type = #tpu.core_type<tc>, window_params = [{transform_indices = @transform_0, window_bounds = array<i64: 8, 128, 128>}, {pipeline_mode = #tpu.pipeline_mode<synchronous>, transform_indices = @transform_1, window_bounds = array<i64: 128, 128>}, {pipeline_mode = #tpu.pipeline_mode<synchronous>, transform_indices = @transform_2, window_bounds = array<i64: 1, 128>}, {transform_indices = @transform_3, window_bounds = array<i64: 8, 128, 128>}]} {
    %c0 = arith.constant 0 : index
    %c0_0 = arith.constant 0 : index
    %c0_1 = arith.constant 0 : index
    %0 = vector.load %arg1[%c0, %c0_0, %c0_1] : memref<8x128x128xf32, #tpu.memory_space<vmem>>, vector<8x128x128xf32>
    %1 = vector.shape_cast %0 : vector<8x128x128xf32> to vector<1024x128xf32>
    %c0_2 = arith.constant 0 : index
    %c0_3 = arith.constant 0 : index
    %2 = vector.load %arg2[%c0_2, %c0_3] : memref<128x128xf32, #tpu.memory_space<vmem>>, vector<128x128xf32>
    %cst = arith.constant dense<0.000000e+00> : vector<1024x128xf32>
    %3 = tpu.matmul %1, %2, %cst {dimension_numbers = #tpu.dot_dimension_numbers<[1], [0], [0], [1], [0, 0, 1, 1], [], []>} : vector<1024x128xf32>, vector<128x128xf32>, vector<1024x128xf32> -> vector<1024x128xf32>
    %c0_4 = arith.constant 0 : index
    %c0_5 = arith.constant 0 : index
    %4 = vector.load %arg3[%c0_4, %c0_5] : memref<1x128xf32, #tpu.memory_space<vmem>>, vector<1x128xf32>
    %5 = vector.broadcast %4 : vector<1x128xf32> to vector<1024x128xf32>
    %6 = arith.addf %3, %5 : vector<1024x128xf32>
    %7 = arith.mulf %6, %6 : vector<1024x128xf32>
    %cst_6 = arith.constant dense<0.000000e+00> : vector<1024xf32>
    %8 = vector.multi_reduction <add>, %7, %cst_6 [1] : vector<1024x128xf32> to vector<1024xf32>
    %9 = vector.shape_cast %8 : vector<1024xf32> to vector<1024x1xf32>
    %cst_7 = arith.constant 1.000000e-24 : f32
    %10 = vector.broadcast %cst_7 : f32 to vector<1024x1xf32>
    %11 = arith.maximumf %9, %10 : vector<1024x1xf32>
    %12 = math.rsqrt %11 : vector<1024x1xf32>
    %13 = vector.broadcast %12 : vector<1024x1xf32> to vector<1024x128xf32>
    %14 = arith.mulf %6, %13 : vector<1024x128xf32>
    %15 = vector.shape_cast %14 : vector<1024x128xf32> to vector<8x128x128xf32>
    %c0_8 = arith.constant 0 : index
    %c0_9 = arith.constant 0 : index
    %c0_10 = arith.constant 0 : index
    %16 = vector.load %arg4[%c0_8, %c0_9, %c0_10] : memref<8x128x128xf32, #tpu.memory_space<vmem>>, vector<8x128x128xf32>
    tpu.vector_store %arg4[%c0_8, %c0_9, %c0_10], %15 {strides = array<i32>} : memref<8x128x128xf32, #tpu.memory_space<vmem>>, vector<8x128x128xf32>,
    return
  }
  func.func @transform_0(%arg0: i32) -> (i32, i32, i32) {
    %c0_i32 = arith.constant 0 : i32
    %c0_i32_0 = arith.constant 0 : i32
    %c0_i32_1 = arith.constant 0 : i32
    return %c0_i32, %arg0, %c0_i32_0 : i32, i32, i32
  }
  func.func @transform_1(%arg0: i32) -> (i32, i32) {
    %c0_i32 = arith.constant 0 : i32
    %c0_i32_0 = arith.constant 0 : i32
    %c0_i32_1 = arith.constant 0 : i32
    return %c0_i32, %c0_i32_0 : i32, i32
  }
  func.func @transform_2(%arg0: i32) -> (i32, i32) {
    %c0_i32 = arith.constant 0 : i32
    %c0_i32_0 = arith.constant 0 : i32
    %c0_i32_1 = arith.constant 0 : i32
    return %c0_i32, %c0_i32_0 : i32, i32
  }
  func.func @transform_3(%arg0: i32) -> (i32, i32, i32) {
    %c0_i32 = arith.constant 0 : i32
    %c0_i32_0 = arith.constant 0 : i32
    %c0_i32_1 = arith.constant 0 : i32
    return %c0_i32, %arg0, %c0_i32_0 : i32, i32, i32
  }
}

</mosaic_0001>

<llo_original>
// kernel: tpu_custom_call.1
$region0: #{tpu_custom_call.1}
  #allocation0 [shape = 'u32[]', space=smem, size = 0x4, offset = 0x4, fixed_abs, tag = 'smem constant byte address 0x4 - core index']
  #allocation1 [shape = 'u32[144,128]{1,0:T(1,128)}', space=vmem, size = 0x12000, scoped, tag = 'internal scratch']
  %s0 = inlined_call_operand.hbm [shape: f32[8,128,128], index: 0, kind: input, shape index: {}]
  %s1 = inlined_call_operand.hbm [shape: f32[128,128], index: 1, kind: input, shape index: {}]
  %s2 = inlined_call_operand.vmem [shape: f32[1,128], index: 2, kind: input, shape index: {}]
  %s3 = inlined_call_operand.hbm [shape: f32[8,128,128], index: 3, kind: output, shape index: {}]
  %s4 = sld [smem:[#allocation0]]
  $region30: #{tpu_custom_call.1} parent=0
    _
  %s6 = ssub.s32 1, %s4
  %s7 = scalar_select 0, %s6, %s4
  $region1: #{tpu_custom_call.1} parent=0
    #allocation2 [shape = 'u8[524288]{0}', space=vmem, size = 0x80000, scoped, tag = 'input window, operand 0, single buffered']
    #allocation3 [shape = 's32[1]{0}', space=sflag, size = 0x4, scoped, tag = 'scoped memory for tpu_custom_call.1']
    #allocation4 [shape = 's32[1]{0}', space=sflag, size = 0x4, scoped, tag = 'scoped memory for tpu_custom_call.1']
    #allocation5 [shape = 'u8[65536]{0}', space=vmem, size = 0x10000, scoped, tag = 'input window, operand 1, single buffered']
    #allocation6 [shape = 's32[1]{0}', space=sflag, size = 0x4, scoped, tag = 'scoped memory for tpu_custom_call.1']
    #allocation7 [shape = 'u8[524288]{0}', space=vmem, size = 0x80000, scoped, tag = 'output window, operand 0, single buffered']
    %8 = vsyncpa [#allocation3], 0
    %9 = vsyncpa [#allocation6], 0
    %10 = vsyncpa [#allocation4], 0
    // Predicated region
    $region2: #{tpu_custom_call.1} parent=1 // pred_check
      _
    $region3: #{tpu_custom_call.1} parent=1 // pred_check_branch
      %12 = sbr.rel (0) target = $region5
    $region4: #{tpu_custom_call.1} parent=1 // pred_region
      %s14 = ssub.s32 16384, 16384
      %15 = vsyncadd [#allocation3], %s14
      %s16 = sshll.u32 [#allocation2], 4
      %s17 = int_to_ptr.vmem [resolvable:$true] %s16
      %22 = dma.hbm_to_vmem [thread:$0]  %s0, 16384, %s17, [#allocation3], 128, 128, 8
    $region5: #{tpu_custom_call.1} parent=1 // pred_fallthru
      _
    // Predicated region
    $region6: #{tpu_custom_call.1} parent=1 // pred_check
      _
    $region7: #{tpu_custom_call.1} parent=1 // pred_check_branch
      %24 = sbr.rel (0) target = $region9
    $region8: #{tpu_custom_call.1} parent=1 // pred_region
      %s26 = ssub.s32 2048, 2048
      %27 = vsyncadd [#allocation6], %s26
      %s28 = sshll.u32 [#allocation5], 4
      %s29 = int_to_ptr.vmem [resolvable:$true] %s28
      %34 = dma.hbm_to_vmem [thread:$0]  %s1, 2048, %s29, [#allocation6], 128, 128, 8
    $region9: #{tpu_custom_call.1} parent=1 // pred_fallthru
      _
    // Predicated region
    $region10: #{tpu_custom_call.1} parent=1 // pred_check
      _
    $region11: #{tpu_custom_call.1} parent=1 // pred_check_branch
      %36 = sbr.rel (0) target = $region13
    $region12: #{tpu_custom_call.1} parent=1 // pred_region
      _
    $region13: #{tpu_custom_call.1} parent=1 // pred_fallthru
      _
    // Predicated region
    $region14: #{tpu_custom_call.1} parent=1 // pred_check
      _
    $region15: #{tpu_custom_call.1} parent=1 // pred_check_branch
      %38 = sbr.rel (0) target = $region17
    $region16: #{tpu_custom_call.1} parent=1 // pred_region
      %39 = dma.done [#allocation3], 16384
    $region17: #{tpu_custom_call.1} parent=1 // pred_fallthru
      _
    // Predicated region
    $region18: #{tpu_custom_call.1} parent=1 // pred_check
      _
    $region19: #{tpu_custom_call.1} parent=1 // pred_check_branch
      %41 = sbr.rel (0) target = $region21
    $region20: #{tpu_custom_call.1} parent=1 // pred_region
      %42 = dma.done [#allocation6], 2048
    $region21: #{tpu_custom_call.1} parent=1 // pred_fallthru
      _
    %v43 = vld [vmem:[#allocation2] sm:$0xff]
    %v44 = vld [vmem:[#allocation2 + $0x8] sm:$0xff]
    %v45 = vld [vmem:[#allocation2 + $0x10] sm:$0xff]
    %v46 = vld [vmem:[#allocation2 + $0x18] sm:$0xff]
    %v47 = vld [vmem:[#allocation2 + $0x20] sm:$0xff]
    %v48 = vld [vmem:[#allocation2 + $0x28] sm:$0xff]
    %v49 = vld [vmem:[#allocation2 + $0x30] sm:$0xff]
    %v50 = vld [vmem:[#allocation2 + $0x38] sm:$0xff]
    %v51 = vld [vmem:[#allocation2 + $0x40] sm:$0xff]
    %v52 = vld [vmem:[#allocation2 + $0x48] sm:$0xff]
    %v53 = vld [vmem:[#allocation2 + $0x50] sm:$0xff]
    %v54 = vld [vmem:[#allocation2 + $0x58] sm:$0xff]
    %v55 = vld [vmem:[#allocation2 + $0x60] sm:$0xff]
    %v56 = vld [vmem:[#allocation2 + $0x68] sm:$0xff]
    %v57 = vld [vmem:[#allocation2 + $0x70] sm:$0xff]
    %v58 = vld [vmem:[#allocation2 + $0x78] sm:$0xff]
    %v59 = vld [vmem:[#allocation2 + $0x80] sm:$0xff]
    %v60 = vld [vmem:[#allocation2 + $0x88] sm:$0xff]
    %v61 = vld [vmem:[#allocation2 + $0x90] sm:$0xff]
    %v62 = vld [vmem:[#allocation2 + $0x98] sm:$0xff]
    %v63 = vld [vmem:[#allocation2 + $0xa0] sm:$0xff]
    %v64 = vld [vmem:[#allocation2 + $0xa8] sm:$0xff]
    %v65 = vld [vmem:[#allocation2 + $0xb0] sm:$0xff]
    %v66 = vld [vmem:[#allocation2 + $0xb8] sm:$0xff]
    %v67 = vld [vmem:[#allocation2 + $0xc0] sm:$0xff]
    %v68 = vld [vmem:[#allocation2 + $0xc8] sm:$0xff]
    %v69 = vld [vmem:[#allocation2 + $0xd0] sm:$0xff]
    %v70 = vld [vmem:[#allocation2 + $0xd8] sm:$0xff]
    %v71 = vld [vmem:[#allocation2 + $0xe0] sm:$0xff]
    %v72 = vld [vmem:[#allocation2 + $0xe8] sm:$0xff]
    %v73 = vld [vmem:[#allocation2 + $0xf0] sm:$0xff]
    %v74 = vld [vmem:[#allocation2 + $0xf8] sm:$0xff]
    %v75 = vld [vmem:[#allocation2 + $0x100] sm:$0xff]
    %v76 = vld [vmem:[#allocation2 + $0x108] sm:$0xff]
    %v77 = vld [vmem:[#allocation2 + $0x110] sm:$0xff]
    %v78 = vld [vmem:[#allocation2 + $0x118] sm:$0xff]
    %v79 = vld [vmem:[#allocation2 + $0x120] sm:$0xff]
    %v80 = vld [vmem:[#allocation2 + $0x128] sm:$0xff]
    %v81 = vld [vmem:[#allocation2 + $0x130] sm:$0xff]
    %v82 = vld [vmem:[#allocation2 + $0x138] sm:$0xff]
    %v83 = vld [vmem:[#allocation2 + $0x140] sm:$0xff]
    %v84 = vld [vmem:[#allocation2 + $0x148] sm:$0xff]
    %v85 = vld [vmem:[#allocation2 + $0x150] sm:$0xff]
    %v86 = vld [vmem:[#allocation2 + $0x158] sm:$0xff]
    %v87 = vld [vmem:[#allocation2 + $0x160] sm:$0xff]
    %v88 = vld [vmem:[#allocation2 + $0x168] sm:$0xff]
    %v89 = vld [vmem:[#allocation2 + $0x170] sm:$0xff]
    %v90 = vld [vmem:[#allocation2 + $0x178] sm:$0xff]
    %v91 = vld [vmem:[#allocation2 + $0x180] sm:$0xff]
    %v92 = vld [vmem:[#allocation2 + $0x188] sm:$0xff]
    %v93 = vld [vmem:[#allocation2 + $0x190] sm:$0xff]
    %v94 = vld [vmem:[#allocation2 + $0x198] sm:$0xff]
    %v95 = vld [vmem:[#allocation2 + $0x1a0] sm:$0xff]
    %v96 = vld [vmem:[#allocation2 + $0x1a8] sm:$0xff]
    %v97 = vld [vmem:[#allocation2 + $0x1b0] sm:$0xff]
    %v98 = vld [vmem:[#allocation2 + $0x1b8] sm:$0xff]
    %v99 = vld [vmem:[#allocation2 + $0x1c0] sm:$0xff]
    %v100 = vld [vmem:[#allocation2 + $0x1c8] sm:$0xff]
    %v101 = vld [vmem:[#allocation2 + $0x1d0] sm:$0xff]
    %v102 = vld [vmem:[#allocation2 + $0x1d8] sm:$0xff]
    %v103 = vld [vmem:[#allocation2 + $0x1e0] sm:$0xff]
    %v104 = vld [vmem:[#allocation2 + $0x1e8] sm:$0xff]
    %v105 = vld [vmem:[#allocation2 + $0x1f0] sm:$0xff]
    %v106 = vld [vmem:[#allocation2 + $0x1f8] sm:$0xff]
    %v107 = vld [vmem:[#allocation2 + $0x200] sm:$0xff]
    %v108 = vld [vmem:[#allocation2 + $0x208] sm:$0xff]
    %v109 = vld [vmem:[#allocation2 + $0x210] sm:$0xff]
    %v110 = vld [vmem:[#allocation2 + $0x218] sm:$0xff]
    %v111 = vld [vmem:[#allocation2 + $0x220] sm:$0xff]
    %v112 = vld [vmem:[#allocation2 + $0x228] sm:$0xff]
    %v113 = vld [vmem:[#allocation2 + $0x230] sm:$0xff]
    %v114 = vld [vmem:[#allocation2 + $0x238] sm:$0xff]
    %v115 = vld [vmem:[#allocation2 + $0x240] sm:$0xff]
    %v116 = vld [vmem:[#allocation2 + $0x248] sm:$0xff]
    %v117 = vld [vmem:[#allocation2 + $0x250] sm:$0xff]
    %v118 = vld [vmem:[#allocation2 + $0x258] sm:$0xff]
    %v119 = vld [vmem:[#allocation2 + $0x260] sm:$0xff]
    %v120 = vld [vmem:[#allocation2 + $0x268] sm:$0xff]
    %v121 = vld [vmem:[#allocation2 + $0x270] sm:$0xff]
    %v122 = vld [vmem:[#allocation2 + $0x278] sm:$0xff]
    %v123 = vld [vmem:[#allocation2 + $0x280] sm:$0xff]
    %v124 = vld [vmem:[#allocation2 + $0x288] sm:$0xff]
    %v125 = vld [vmem:[#allocation2 + $0x290] sm:$0xff]
    %v126 = vld [vmem:[#allocation2 + $0x298] sm:$0xff]
    %v127 = vld [vmem:[#allocation2 + $0x2a0] sm:$0xff]
    %v128 = vld [vmem:[#allocation2 + $0x2a8] sm:$0xff]
    %v129 = vld [vmem:[#allocation2 + $0x2b0] sm:$0xff]
    %v130 = vld [vmem:[#allocation2 + $0x2b8] sm:$0xff]
    %v131 = vld [vmem:[#allocation2 + $0x2c0] sm:$0xff]
    %v132 = vld [vmem:[#allocation2 + $0x2c8] sm:$0xff]
    %v133 = vld [vmem:[#allocation2 + $0x2d0] sm:$0xff]
    %v134 = vld [vmem:[#allocation2 + $0x2d8] sm:$0xff]
    %v135 = vld [vmem:[#allocation2 + $0x2e0] sm:$0xff]
    %v136 = vld [vmem:[#allocation2 + $0x2e8] sm:$0xff]
    %v137 = vld [vmem:[#allocation2 + $0x2f0] sm:$0xff]
    %v138 = vld [vmem:[#allocation2 + $0x2f8] sm:$0xff]
    %v139 = vld [vmem:[#allocation2 + $0x300] sm:$0xff]
    %v140 = vld [vmem:[#allocation2 + $0x308] sm:$0xff]
    %v141 = vld [vmem:[#allocation2 + $0x310] sm:$0xff]
    %v142 = vld [vmem:[#allocation2 + $0x318] sm:$0xff]
    %v143 = vld [vmem:[#allocation2 + $0x320] sm:$0xff]
    %v144 = vld [vmem:[#allocation2 + $0x328] sm:$0xff]
    %v145 = vld [vmem:[#allocation2 + $0x330] sm:$0xff]
    %v146 = vld [vmem:[#allocation2 + $0x338] sm:$0xff]
    %v147 = vld [vmem:[#allocation2 + $0x340] sm:$0xff]
    %v148 = vld [vmem:[#allocation2 + $0x348] sm:$0xff]
    %v149 = vld [vmem:[#allocation2 + $0x350] sm:$0xff]
    %v150 = vld [vmem:[#allocation2 + $0x358] sm:$0xff]
    %v151 = vld [vmem:[#allocation2 + $0x360] sm:$0xff]
    %v152 = vld [vmem:[#allocation2 + $0x368] sm:$0xff]
    %v153 = vld [vmem:[#allocation2 + $0x370] sm:$0xff]
    %v154 = vld [vmem:[#allocation2 + $0x378] sm:$0xff]
    %v155 = vld [vmem:[#allocation2 + $0x380] sm:$0xff]
    %v156 = vld [vmem:[#allocation2 + $0x388] sm:$0xff]
    %v157 = vld [vmem:[#allocation2 + $0x390] sm:$0xff]
    %v158 = vld [vmem:[#allocation2 + $0x398] sm:$0xff]
    %v159 = vld [vmem:[#allocation2 + $0x3a0] sm:$0xff]
    %v160 = vld [vmem:[#allocation2 + $0x3a8] sm:$0xff]
    %v161 = vld [vmem:[#allocation2 + $0x3b0] sm:$0xff]
    %v162 = vld [vmem:[#allocation2 + $0x3b8] sm:$0xff]
    %v163 = vld [vmem:[#allocation2 + $0x3c0] sm:$0xff]
    %v164 = vld [vmem:[#allocation2 + $0x3c8] sm:$0xff]
    %v165 = vld [vmem:[#allocation2 + $0x3d0] sm:$0xff]
    %v166 = vld [vmem:[#allocation2 + $0x3d8] sm:$0xff]
    %v167 = vld [vmem:[#allocation2 + $0x3e0] sm:$0xff]
    %v168 = vld [vmem:[#allocation2 + $0x3e8] sm:$0xff]
    %v169 = vld [vmem:[#allocation2 + $0x3f0] sm:$0xff]
    %v170 = vld [vmem:[#allocation2 + $0x3f8] sm:$0xff]
    %v171 = vld [vmem:[#allocation5] sm:$0xff]
    %v172 = vld [vmem:[#allocation5 + $0x8] sm:$0xff]
    %v173 = vld [vmem:[#allocation5 + $0x10] sm:$0xff]
    %v174 = vld [vmem:[#allocation5 + $0x18] sm:$0xff]
    %v175 = vld [vmem:[#allocation5 + $0x20] sm:$0xff]
    %v176 = vld [vmem:[#allocation5 + $0x28] sm:$0xff]
    %v177 = vld [vmem:[#allocation5 + $0x30] sm:$0xff]
    %v178 = vld [vmem:[#allocation5 + $0x38] sm:$0xff]
    %v179 = vld [vmem:[#allocation5 + $0x40] sm:$0xff]
    %v180 = vld [vmem:[#allocation5 + $0x48] sm:$0xff]
    %v181 = vld [vmem:[#allocation5 + $0x50] sm:$0xff]
    %v182 = vld [vmem:[#allocation5 + $0x58] sm:$0xff]
    %v183 = vld [vmem:[#allocation5 + $0x60] sm:$0xff]
    %v184 = vld [vmem:[#allocation5 + $0x68] sm:$0xff]
    %v185 = vld [vmem:[#allocation5 + $0x70] sm:$0xff]
    %v186 = vld [vmem:[#allocation5 + $0x78] sm:$0xff]
    %v187 = vld [vmem:[%s2] sm:$0x1]
    %v189 = vlaneseq
    %v190 = vshrl.u32 %v189, 7
    %v191 = vsub.s32 0, %v190
    %v192 = vrot.slane %v187, %v191
    %194 = vmatprep.subr.mxu0 0.0
    %195 = vmatpush1.msra.mxu0 %v186
    %196 = vmatprep.subr.mxu0 0.0
    %197 = vmatpush1.msra.mxu0 %v185
    %198 = vmatprep.subr.mxu0 0.0
    %199 = vmatpush1.msra.mxu0 %v184
    %200 = vmatprep.subr.mxu0 0.0
    %201 = vmatpush1.msra.mxu0 %v183
    %202 = vmatprep.subr.mxu0 0.0
    %203 = vmatpush1.msra.mxu0 %v182
    %204 = vmatprep.subr.mxu0 0.0
    %205 = vmatpush1.msra.mxu0 %v181
    %206 = vmatprep.subr.mxu0 0.0
    %207 = vmatpush1.msra.mxu0 %v180
    %208 = vmatprep.subr.mxu0 0.0
    %209 = vmatpush1.msra.mxu0 %v179
    %210 = vmatprep.subr.mxu0 0.0
    %211 = vmatpush1.msra.mxu0 %v178
    %212 = vmatprep.subr.mxu0 0.0
    %213 = vmatpush1.msra.mxu0 %v177
    %214 = vmatprep.subr.mxu0 0.0
    %215 = vmatpush1.msra.mxu0 %v176
    %216 = vmatprep.subr.mxu0 0.0
    %217 = vmatpush1.msra.mxu0 %v175
    %218 = vmatprep.subr.mxu0 0.0
    %219 = vmatpush1.msra.mxu0 %v174
    %220 = vmatprep.subr.mxu0 0.0
    %221 = vmatpush1.msra.mxu0 %v173
    %222 = vmatprep.subr.mxu0 0.0
    %223 = vmatpush1.msra.mxu0 %v172
    %224 = vmatprep.subr.mxu0 0.0
    %225 = vmatpush1.msra.mxu0 %v171
    %226 = vmatprep.subr.mxu0 0.0
    %227 = vmatpush2.msra.mxu0 0.0
    %228 = vmatprep.subr.mxu0 0.0
    %229 = vmatpush2.msra.mxu0 0.0
    %230 = vmatprep.subr.mxu0 0.0
    %231 = vmatpush2.msra.mxu0 0.0
    %232 = vmatprep.subr.mxu0 0.0
    %233 = vmatpush2.msra.mxu0 0.0
    %234 = vmatprep.subr.mxu0 0.0
    %235 = vmatpush2.msra.mxu0 0.0
    %236 = vmatprep.subr.mxu0 0.0
    %237 = vmatpush2.msra.mxu0 0.0
    %238 = vmatprep.subr.mxu0 0.0
    %239 = vmatpush2.msra.mxu0 0.0
    %240 = vmatprep.subr.mxu0 0.0
    %241 = vmatpush2.msra.mxu0 0.0
    %242 = vmatprep.subr.mxu0 0.0
    %243 = vmatpush2.msra.mxu0 0.0
    %244 = vmatprep.subr.mxu0 0.0
    %245 = vmatpush2.msra.mxu0 0.0
    %246 = vmatprep.subr.mxu0 0.0
    %247 = vmatpush2.msra.mxu0 0.0
    %248 = vmatprep.subr.mxu0 0.0
    %249 = vmatpush2.msra.mxu0 0.0
    %250 = vmatprep.subr.mxu0 0.0
    %251 = vmatpush2.msra.mxu0 0.0
    %252 = vmatprep.subr.mxu0 0.0
    %253 = vmatpush2.msra.mxu0 0.0
    %254 = vmatprep.subr.mxu0 0.0
    %255 = vmatpush2.msra.mxu0 0.0
    %256 = vmatprep.subr.mxu0 0.0
    %257 = vmatpush2.msra.mxu0 0.0
    %258 = vmatprep.mubr.f32.mxu0 0.0
    %259 = vmatmul.mubr.f32.gmra.mxu0 %v43
    %v260 = vpop.f32.mrf.mxu0
    %v261 = vadd.f32 %v192, %v260
    %v262 = vpop.f32.mrf.mxu0
    %263 = vmatprep.mubr.f32.mxu0 0.0
    %264 = vmatmul.mubr.f32.gmra.mxu0 %v44
    %v265 = vpop.f32.mrf.mxu0
    %v266 = vadd.f32 %v192, %v265
    %v267 = vpop.f32.mrf.mxu0
    %268 = vmatprep.mubr.f32.mxu0 0.0
    %269 = vmatmul.mubr.f32.gmra.mxu0 %v45
    %v270 = vpop.f32.mrf.mxu0
    %v271 = vadd.f32 %v192, %v270
    %v272 = vpop.f32.mrf.mxu0
    %273 = vmatprep.mubr.f32.mxu0 0.0
    %274 = vmatmul.mubr.f32.gmra.mxu0 %v46
    %v275 = vpop.f32.mrf.mxu0
    %v276 = vadd.f32 %v192, %v275
    %v277 = vpop.f32.mrf.mxu0
    %278 = vmatprep.mubr.f32.mxu0 0.0
    %279 = vmatmul.mubr.f32.gmra.mxu0 %v47
    %v280 = vpop.f32.mrf.mxu0
    %v281 = vadd.f32 %v192, %v280
    %v282 = vpop.f32.mrf.mxu0
    %283 = vmatprep.mubr.f32.mxu0 0.0
    %284 = vmatmul.mubr.f32.gmra.mxu0 %v48
    %v285 = vpop.f32.mrf.mxu0
    %v286 = vadd.f32 %v192, %v285
    %v287 = vpop.f32.mrf.mxu0
    %288 = vmatprep.mubr.f32.mxu0 0.0
    %289 = vmatmul.mubr.f32.gmra.mxu0 %v49
    %v290 = vpop.f32.mrf.mxu0
    %v291 = vadd.f32 %v192, %v290
    %v292 = vpop.f32.mrf.mxu0
    %293 = vmatprep.mubr.f32.mxu0 0.0
    %294 = vmatmul.mubr.f32.gmra.mxu0 %v50
    %v295 = vpop.f32.mrf.mxu0
    %v296 = vadd.f32 %v192, %v295
    %v297 = vpop.f32.mrf.mxu0
    %298 = vmatprep.mubr.f32.mxu0 0.0
    %299 = vmatmul.mubr.f32.gmra.mxu0 %v51
    %v300 = vpop.f32.mrf.mxu0
    %v301 = vadd.f32 %v192, %v300
    %v302 = vpop.f32.mrf.mxu0
    %303 = vmatprep.mubr.f32.mxu0 0.0
    %304 = vmatmul.mubr.f32.gmra.mxu0 %v52
    %v305 = vpop.f32.mrf.mxu0
    %v306 = vadd.f32 %v192, %v305
    %v307 = vpop.f32.mrf.mxu0
    %308 = vmatprep.mubr.f32.mxu0 0.0
    %309 = vmatmul.mubr.f32.gmra.mxu0 %v53
    %v310 = vpop.f32.mrf.mxu0
    %v311 = vadd.f32 %v192, %v310
    %v312 = vpop.f32.mrf.mxu0
    %313 = vmatprep.mubr.f32.mxu0 0.0
    %314 = vmatmul.mubr.f32.gmra.mxu0 %v54
    %v315 = vpop.f32.mrf.mxu0
    %v316 = vadd.f32 %v192, %v315
    %v317 = vpop.f32.mrf.mxu0
    %318 = vmatprep.mubr.f32.mxu0 0.0
    %319 = vmatmul.mubr.f32.gmra.mxu0 %v55
    %v320 = vpop.f32.mrf.mxu0
    %v321 = vadd.f32 %v192, %v320
    %v322 = vpop.f32.mrf.mxu0
    %323 = vmatprep.mubr.f32.mxu0 0.0
    %324 = vmatmul.mubr.f32.gmra.mxu0 %v56
    %v325 = vpop.f32.mrf.mxu0
    %v326 = vadd.f32 %v192, %v325
    %v327 = vpop.f32.mrf.mxu0
    %328 = vmatprep.mubr.f32.mxu0 0.0
    %329 = vmatmul.mubr.f32.gmra.mxu0 %v57
    %v330 = vpop.f32.mrf.mxu0
    %v331 = vadd.f32 %v192, %v330
    %v332 = vpop.f32.mrf.mxu0
    %333 = vmatprep.mubr.f32.mxu0 0.0
    %334 = vmatmul.mubr.f32.gmra.mxu0 %v58
    %v335 = vpop.f32.mrf.mxu0
    %v336 = vadd.f32 %v192, %v335
    %v337 = vpop.f32.mrf.mxu0
    %338 = vmatprep.mubr.f32.mxu0 0.0
    %339 = vmatmul.mubr.f32.gmra.mxu0 %v59
    %v340 = vpop.f32.mrf.mxu0
    %v341 = vadd.f32 %v192, %v340
    %v342 = vpop.f32.mrf.mxu0
    %343 = vmatprep.mubr.f32.mxu0 0.0
    %344 = vmatmul.mubr.f32.gmra.mxu0 %v60
    %v345 = vpop.f32.mrf.mxu0
    %v346 = vadd.f32 %v192, %v345
    %v347 = vpop.f32.mrf.mxu0
    %348 = vmatprep.mubr.f32.mxu0 0.0
    %349 = vmatmul.mubr.f32.gmra.mxu0 %v61
    %v350 = vpop.f32.mrf.mxu0
    %v351 = vadd.f32 %v192, %v350
    %v352 = vpop.f32.mrf.mxu0
    %353 = vmatprep.mubr.f32.mxu0 0.0
    %354 = vmatmul.mubr.f32.gmra.mxu0 %v62
    %v355 = vpop.f32.mrf.mxu0
    %v356 = vadd.f32 %v192, %v355
    %v357 = vpop.f32.mrf.mxu0
    %358 = vmatprep.mubr.f32.mxu0 0.0
    %359 = vmatmul.mubr.f32.gmra.mxu0 %v63
    %v360 = vpop.f32.mrf.mxu0
    %v361 = vadd.f32 %v192, %v360
    %v362 = vpop.f32.mrf.mxu0
    %363 = vmatprep.mubr.f32.mxu0 0.0
    %364 = vmatmul.mubr.f32.gmra.mxu0 %v64
    %v365 = vpop.f32.mrf.mxu0
    %v366 = vadd.f32 %v192, %v365
    %v367 = vpop.f32.mrf.mxu0
    %368 = vmatprep.mubr.f32.mxu0 0.0
    %369 = vmatmul.mubr.f32.gmra.mxu0 %v65
    %v370 = vpop.f32.mrf.mxu0
    %v371 = vadd.f32 %v192, %v370
    %v372 = vpop.f32.mrf.mxu0
    %373 = vmatprep.mubr.f32.mxu0 0.0
    %374 = vmatmul.mubr.f32.gmra.mxu0 %v66
    %v375 = vpop.f32.mrf.mxu0
    %v376 = vadd.f32 %v192, %v375
    %v377 = vpop.f32.mrf.mxu0
    %378 = vmatprep.mubr.f32.mxu0 0.0
    %379 = vmatmul.mubr.f32.gmra.mxu0 %v67
    %v380 = vpop.f32.mrf.mxu0
    %v381 = vadd.f32 %v192, %v380
    %v382 = vpop.f32.mrf.mxu0
    %383 = vmatprep.mubr.f32.mxu0 0.0
    %384 = vmatmul.mubr.f32.gmra.mxu0 %v68
    %v385 = vpop.f32.mrf.mxu0
    %v386 = vadd.f32 %v192, %v385
    %v387 = vpop.f32.mrf.mxu0
    %388 = vmatprep.mubr.f32.mxu0 0.0
    %389 = vmatmul.mubr.f32.gmra.mxu0 %v69
    %v390 = vpop.f32.mrf.mxu0
    %v391 = vadd.f32 %v192, %v390
    %v392 = vpop.f32.mrf.mxu0
    %393 = vmatprep.mubr.f32.mxu0 0.0
    %394 = vmatmul.mubr.f32.gmra.mxu0 %v70
    %v395 = vpop.f32.mrf.mxu0
    %v396 = vadd.f32 %v192, %v395
    %v397 = vpop.f32.mrf.mxu0
    %398 = vmatprep.mubr.f32.mxu0 0.0
    %399 = vmatmul.mubr.f32.gmra.mxu0 %v71
    %v400 = vpop.f32.mrf.mxu0
    %v401 = vadd.f32 %v192, %v400
    %v402 = vpop.f32.mrf.mxu0
    %403 = vmatprep.mubr.f32.mxu0 0.0
    %404 = vmatmul.mubr.f32.gmra.mxu0 %v72
    %v405 = vpop.f32.mrf.mxu0
    %v406 = vadd.f32 %v192, %v405
    %v407 = vpop.f32.mrf.mxu0
    %408 = vmatprep.mubr.f32.mxu0 0.0
    %409 = vmatmul.mubr.f32.gmra.mxu0 %v73
    %v410 = vpop.f32.mrf.mxu0
    %v411 = vadd.f32 %v192, %v410
    %v412 = vpop.f32.mrf.mxu0
    %413 = vmatprep.mubr.f32.mxu0 0.0
    %414 = vmatmul.mubr.f32.gmra.mxu0 %v74
    %v415 = vpop.f32.mrf.mxu0
    %v416 = vadd.f32 %v192, %v415
    %v417 = vpop.f32.mrf.mxu0
    %418 = vmatprep.mubr.f32.mxu0 0.0
    %419 = vmatmul.mubr.f32.gmra.mxu0 %v75
    %v420 = vpop.f32.mrf.mxu0
    %v421 = vadd.f32 %v192, %v420
    %v422 = vpop.f32.mrf.mxu0
    %423 = vmatprep.mubr.f32.mxu0 0.0
    %424 = vmatmul.mubr.f32.gmra.mxu0 %v76
    %v425 = vpop.f32.mrf.mxu0
    %v426 = vadd.f32 %v192, %v425
    %v427 = vpop.f32.mrf.mxu0
    %428 = vmatprep.mubr.f32.mxu0 0.0
    %429 = vmatmul.mubr.f32.gmra.mxu0 %v77
    %v430 = vpop.f32.mrf.mxu0
    %v431 = vadd.f32 %v192, %v430
    %v432 = vpop.f32.mrf.mxu0
    %433 = vmatprep.mubr.f32.mxu0 0.0
    %434 = vmatmul.mubr.f32.gmra.mxu0 %v78
    %v435 = vpop.f32.mrf.mxu0
    %v436 = vadd.f32 %v192, %v435
    %v437 = vpop.f32.mrf.mxu0
    %438 = vmatprep.mubr.f32.mxu0 0.0
    %439 = vmatmul.mubr.f32.gmra.mxu0 %v79
    %v440 = vpop.f32.mrf.mxu0
    %v441 = vadd.f32 %v192, %v440
    %v442 = vpop.f32.mrf.mxu0
    %443 = vmatprep.mubr.f32.mxu0 0.0
    %444 = vmatmul.mubr.f32.gmra.mxu0 %v80
    %v445 = vpop.f32.mrf.mxu0
    %v446 = vadd.f32 %v192, %v445
    %v447 = vpop.f32.mrf.mxu0
    %448 = vmatprep.mubr.f32.mxu0 0.0
    %449 = vmatmul.mubr.f32.gmra.mxu0 %v81
    %v450 = vpop.f32.mrf.mxu0
    %v451 = vadd.f32 %v192, %v450
    %v452 = vpop.f32.mrf.mxu0
    %453 = vmatprep.mubr.f32.mxu0 0.0
    %454 = vmatmul.mubr.f32.gmra.mxu0 %v82
    %v455 = vpop.f32.mrf.mxu0
    %v456 = vadd.f32 %v192, %v455
    %v457 = vpop.f32.mrf.mxu0
    %458 = vmatprep.mubr.f32.mxu0 0.0
    %459 = vmatmul.mubr.f32.gmra.mxu0 %v83
    %v460 = vpop.f32.mrf.mxu0
    %v461 = vadd.f32 %v192, %v460
    %v462 = vpop.f32.mrf.mxu0
    %463 = vmatprep.mubr.f32.mxu0 0.0
    %464 = vmatmul.mubr.f32.gmra.mxu0 %v84
    %v465 = vpop.f32.mrf.mxu0
    %v466 = vadd.f32 %v192, %v465
    %v467 = vpop.f32.mrf.mxu0
    %468 = vmatprep.mubr.f32.mxu0 0.0
    %469 = vmatmul.mubr.f32.gmra.mxu0 %v85
    %v470 = vpop.f32.mrf.mxu0
    %v471 = vadd.f32 %v192, %v470
    %v472 = vpop.f32.mrf.mxu0
    %473 = vmatprep.mubr.f32.mxu0 0.0
    %474 = vmatmul.mubr.f32.gmra.mxu0 %v86
    %v475 = vpop.f32.mrf.mxu0
    %v476 = vadd.f32 %v192, %v475
    %v477 = vpop.f32.mrf.mxu0
    %478 = vmatprep.mubr.f32.mxu0 0.0
    %479 = vmatmul.mubr.f32.gmra.mxu0 %v87
    %v480 = vpop.f32.mrf.mxu0
    %v481 = vadd.f32 %v192, %v480
    %v482 = vpop.f32.mrf.mxu0
    %483 = vmatprep.mubr.f32.mxu0 0.0
    %484 = vmatmul.mubr.f32.gmra.mxu0 %v88
    %v485 = vpop.f32.mrf.mxu0
    %v486 = vadd.f32 %v192, %v485
    %v487 = vpop.f32.mrf.mxu0
    %488 = vmatprep.mubr.f32.mxu0 0.0
    %489 = vmatmul.mubr.f32.gmra.mxu0 %v89
    %v490 = vpop.f32.mrf.mxu0
    %v491 = vadd.f32 %v192, %v490
    %v492 = vpop.f32.mrf.mxu0
    %493 = vmatprep.mubr.f32.mxu0 0.0
    %494 = vmatmul.mubr.f32.gmra.mxu0 %v90
    %v495 = vpop.f32.mrf.mxu0
    %v496 = vadd.f32 %v192, %v495
    %v497 = vpop.f32.mrf.mxu0
    %498 = vmatprep.mubr.f32.mxu0 0.0
    %499 = vmatmul.mubr.f32.gmra.mxu0 %v91
    %v500 = vpop.f32.mrf.mxu0
    %v501 = vadd.f32 %v192, %v500
    %v502 = vpop.f32.mrf.mxu0
    %503 = vmatprep.mubr.f32.mxu0 0.0
    %504 = vmatmul.mubr.f32.gmra.mxu0 %v92
    %v505 = vpop.f32.mrf.mxu0
    %v506 = vadd.f32 %v192, %v505
    %v507 = vpop.f32.mrf.mxu0
    %508 = vmatprep.mubr.f32.mxu0 0.0
    %509 = vmatmul.mubr.f32.gmra.mxu0 %v93
    %v510 = vpop.f32.mrf.mxu0
    %v511 = vadd.f32 %v192, %v510
    %v512 = vpop.f32.mrf.mxu0
    %513 = vmatprep.mubr.f32.mxu0 0.0
    %514 = vmatmul.mubr.f32.gmra.mxu0 %v94
    %v515 = vpop.f32.mrf.mxu0
    %v516 = vadd.f32 %v192, %v515
    %v517 = vpop.f32.mrf.mxu0
    %518 = vmatprep.mubr.f32.mxu0 0.0
    %519 = vmatmul.mubr.f32.gmra.mxu0 %v95
    %v520 = vpop.f32.mrf.mxu0
    %v521 = vadd.f32 %v192, %v520
    %v522 = vpop.f32.mrf.mxu0
    %523 = vmatprep.mubr.f32.mxu0 0.0
    %524 = vmatmul.mubr.f32.gmra.mxu0 %v96
    %v525 = vpop.f32.mrf.mxu0
    %v526 = vadd.f32 %v192, %v525
    %v527 = vpop.f32.mrf.mxu0
    %528 = vmatprep.mubr.f32.mxu0 0.0
    %529 = vmatmul.mubr.f32.gmra.mxu0 %v97
    %v530 = vpop.f32.mrf.mxu0
    %v531 = vadd.f32 %v192, %v530
    %v532 = vpop.f32.mrf.mxu0
    %533 = vmatprep.mubr.f32.mxu0 0.0
    %534 = vmatmul.mubr.f32.gmra.mxu0 %v98
    %v535 = vpop.f32.mrf.mxu0
    %v536 = vadd.f32 %v192, %v535
    %v537 = vpop.f32.mrf.mxu0
    %538 = vmatprep.mubr.f32.mxu0 0.0
    %539 = vmatmul.mubr.f32.gmra.mxu0 %v99
    %v540 = vpop.f32.mrf.mxu0
    %v541 = vadd.f32 %v192, %v540
    %v542 = vpop.f32.mrf.mxu0
    %543 = vmatprep.mubr.f32.mxu0 0.0
    %544 = vmatmul.mubr.f32.gmra.mxu0 %v100
    %v545 = vpop.f32.mrf.mxu0
    %v546 = vadd.f32 %v192, %v545
    %v547 = vpop.f32.mrf.mxu0
    %548 = vmatprep.mubr.f32.mxu0 0.0
    %549 = vmatmul.mubr.f32.gmra.mxu0 %v101
    %v550 = vpop.f32.mrf.mxu0
    %v551 = vadd.f32 %v192, %v550
    %v552 = vpop.f32.mrf.mxu0
    %553 = vmatprep.mubr.f32.mxu0 0.0
    %554 = vmatmul.mubr.f32.gmra.mxu0 %v102
    %v555 = vpop.f32.mrf.mxu0
    %v556 = vadd.f32 %v192, %v555
    %v557 = vpop.f32.mrf.mxu0
    %558 = vmatprep.mubr.f32.mxu0 0.0
    %559 = vmatmul.mubr.f32.gmra.mxu0 %v103
    %v560 = vpop.f32.mrf.mxu0
    %v561 = vadd.f32 %v192, %v560
    %v562 = vpop.f32.mrf.mxu0
    %563 = vmatprep.mubr.f32.mxu0 0.0
    %564 = vmatmul.mubr.f32.gmra.mxu0 %v104
    %v565 = vpop.f32.mrf.mxu0
    %v566 = vadd.f32 %v192, %v565
    %v567 = vpop.f32.mrf.mxu0
    %568 = vmatprep.mubr.f32.mxu0 0.0
    %569 = vmatmul.mubr.f32.gmra.mxu0 %v105
    %v570 = vpop.f32.mrf.mxu0
    %v571 = vadd.f32 %v192, %v570
    %v572 = vpop.f32.mrf.mxu0
    %573 = vmatprep.mubr.f32.mxu0 0.0
    %574 = vmatmul.mubr.f32.gmra.mxu0 %v106
    %v575 = vpop.f32.mrf.mxu0
    %v576 = vadd.f32 %v192, %v575
    %v577 = vpop.f32.mrf.mxu0
    %578 = vmatprep.mubr.f32.mxu0 0.0
    %579 = vmatmul.mubr.f32.gmra.mxu0 %v107
    %v580 = vpop.f32.mrf.mxu0
    %v581 = vadd.f32 %v192, %v580
    %v582 = vpop.f32.mrf.mxu0
    %583 = vmatprep.mubr.f32.mxu0 0.0
    %584 = vmatmul.mubr.f32.gmra.mxu0 %v108
    %v585 = vpop.f32.mrf.mxu0
    %v586 = vadd.f32 %v192, %v585
    %v587 = vpop.f32.mrf.mxu0
    %588 = vmatprep.mubr.f32.mxu0 0.0
    %589 = vmatmul.mubr.f32.gmra.mxu0 %v109
    %v590 = vpop.f32.mrf.mxu0
    %v591 = vadd.f32 %v192, %v590
    %v592 = vpop.f32.mrf.mxu0
    %593 = vmatprep.mubr.f32.mxu0 0.0
    %594 = vmatmul.mubr.f32.gmra.mxu0 %v110
    %v595 = vpop.f32.mrf.mxu0
    %v596 = vadd.f32 %v192, %v595
    %v597 = vpop.f32.mrf.mxu0
    %598 = vmatprep.mubr.f32.mxu0 0.0
    %599 = vmatmul.mubr.f32.gmra.mxu0 %v111
    %v600 = vpop.f32.mrf.mxu0
    %v601 = vadd.f32 %v192, %v600
    %v602 = vpop.f32.mrf.mxu0
    %603 = vmatprep.mubr.f32.mxu0 0.0
    %604 = vmatmul.mubr.f32.gmra.mxu0 %v112
    %v605 = vpop.f32.mrf.mxu0
    %v606 = vadd.f32 %v192, %v605
    %v607 = vpop.f32.mrf.mxu0
    %608 = vmatprep.mubr.f32.mxu0 0.0
    %609 = vmatmul.mubr.f32.gmra.mxu0 %v113
    %v610 = vpop.f32.mrf.mxu0
    %v611 = vadd.f32 %v192, %v610
    %v612 = vpop.f32.mrf.mxu0
    %613 = vmatprep.mubr.f32.mxu0 0.0
    %614 = vmatmul.mubr.f32.gmra.mxu0 %v114
    %v615 = vpop.f32.mrf.mxu0
    %v616 = vadd.f32 %v192, %v615
    %v617 = vpop.f32.mrf.mxu0
    %618 = vmatprep.mubr.f32.mxu0 0.0
    %619 = vmatmul.mubr.f32.gmra.mxu0 %v115
    %v620 = vpop.f32.mrf.mxu0
    %v621 = vadd.f32 %v192, %v620
    %v622 = vpop.f32.mrf.mxu0
    %623 = vmatprep.mubr.f32.mxu0 0.0
    %624 = vmatmul.mubr.f32.gmra.mxu0 %v116
    %v625 = vpop.f32.mrf.mxu0
    %v626 = vadd.f32 %v192, %v625
    %v627 = vpop.f32.mrf.mxu0
    %628 = vmatprep.mubr.f32.mxu0 0.0
    %629 = vmatmul.mubr.f32.gmra.mxu0 %v117
    %v630 = vpop.f32.mrf.mxu0
    %v631 = vadd.f32 %v192, %v630
    %v632 = vpop.f32.mrf.mxu0
    %633 = vmatprep.mubr.f32.mxu0 0.0
    %634 = vmatmul.mubr.f32.gmra.mxu0 %v118
    %v635 = vpop.f32.mrf.mxu0
    %v636 = vadd.f32 %v192, %v635
    %v637 = vpop.f32.mrf.mxu0
    %638 = vmatprep.mubr.f32.mxu0 0.0
    %639 = vmatmul.mubr.f32.gmra.mxu0 %v119
    %v640 = vpop.f32.mrf.mxu0
    %v641 = vadd.f32 %v192, %v640
    %v642 = vpop.f32.mrf.mxu0
    %643 = vmatprep.mubr.f32.mxu0 0.0
    %644 = vmatmul.mubr.f32.gmra.mxu0 %v120
    %v645 = vpop.f32.mrf.mxu0
    %v646 = vadd.f32 %v192, %v645
    %v647 = vpop.f32.mrf.mxu0
    %648 = vmatprep.mubr.f32.mxu0 0.0
    %649 = vmatmul.mubr.f32.gmra.mxu0 %v121
    %v650 = vpop.f32.mrf.mxu0
    %v651 = vadd.f32 %v192, %v650
    %v652 = vpop.f32.mrf.mxu0
    %653 = vmatprep.mubr.f32.mxu0 0.0
    %654 = vmatmul.mubr.f32.gmra.mxu0 %v122
    %v655 = vpop.f32.mrf.mxu0
    %v656 = vadd.f32 %v192, %v655
    %v657 = vpop.f32.mrf.mxu0
    %658 = vmatprep.mubr.f32.mxu0 0.0
    %659 = vmatmul.mubr.f32.gmra.mxu0 %v123
    %v660 = vpop.f32.mrf.mxu0
    %v661 = vadd.f32 %v192, %v660
    %v662 = vpop.f32.mrf.mxu0
    %663 = vmatprep.mubr.f32.mxu0 0.0
    %664 = vmatmul.mubr.f32.gmra.mxu0 %v124
    %v665 = vpop.f32.mrf.mxu0
    %v666 = vadd.f32 %v192, %v665
    %v667 = vpop.f32.mrf.mxu0
    %668 = vmatprep.mubr.f32.mxu0 0.0
    %669 = vmatmul.mubr.f32.gmra.mxu0 %v125
    %v670 = vpop.f32.mrf.mxu0
    %v671 = vadd.f32 %v192, %v670
    %v672 = vpop.f32.mrf.mxu0
    %673 = vmatprep.mubr.f32.mxu0 0.0
    %674 = vmatmul.mubr.f32.gmra.mxu0 %v126
    %v675 = vpop.f32.mrf.mxu0
    %v676 = vadd.f32 %v192, %v675
    %v677 = vpop.f32.mrf.mxu0
    %678 = vmatprep.mubr.f32.mxu0 0.0
    %679 = vmatmul.mubr.f32.gmra.mxu0 %v127
    %v680 = vpop.f32.mrf.mxu0
    %v681 = vadd.f32 %v192, %v680
    %v682 = vpop.f32.mrf.mxu0
    %683 = vmatprep.mubr.f32.mxu0 0.0
    %684 = vmatmul.mubr.f32.gmra.mxu0 %v128
    %v685 = vpop.f32.mrf.mxu0
    %v686 = vadd.f32 %v192, %v685
    %v687 = vpop.f32.mrf.mxu0
    %688 = vmatprep.mubr.f32.mxu0 0.0
    %689 = vmatmul.mubr.f32.gmra.mxu0 %v129
    %v690 = vpop.f32.mrf.mxu0
    %v691 = vadd.f32 %v192, %v690
    %v692 = vpop.f32.mrf.mxu0
    %693 = vmatprep.mubr.f32.mxu0 0.0
    %694 = vmatmul.mubr.f32.gmra.mxu0 %v130
    %v695 = vpop.f32.mrf.mxu0
    %v696 = vadd.f32 %v192, %v695
    %v697 = vpop.f32.mrf.mxu0
    %698 = vmatprep.mubr.f32.mxu0 0.0
    %699 = vmatmul.mubr.f32.gmra.mxu0 %v131
    %v700 = vpop.f32.mrf.mxu0
    %v701 = vadd.f32 %v192, %v700
    %v702 = vpop.f32.mrf.mxu0
    %703 = vmatprep.mubr.f32.mxu0 0.0
    %704 = vmatmul.mubr.f32.gmra.mxu0 %v132
    %v705 = vpop.f32.mrf.mxu0
    %v706 = vadd.f32 %v192, %v705
    %v707 = vpop.f32.mrf.mxu0
    %708 = vmatprep.mubr.f32.mxu0 0.0
    %709 = vmatmul.mubr.f32.gmra.mxu0 %v133
    %v710 = vpop.f32.mrf.mxu0
    %v711 = vadd.f32 %v192, %v710
    %v712 = vpop.f32.mrf.mxu0
    %713 = vmatprep.mubr.f32.mxu0 0.0
    %714 = vmatmul.mubr.f32.gmra.mxu0 %v134
    %v715 = vpop.f32.mrf.mxu0
    %v716 = vadd.f32 %v192, %v715
    %v717 = vpop.f32.mrf.mxu0
    %718 = vmatprep.mubr.f32.mxu0 0.0
    %719 = vmatmul.mubr.f32.gmra.mxu0 %v135
    %v720 = vpop.f32.mrf.mxu0
    %v721 = vadd.f32 %v192, %v720
    %v722 = vpop.f32.mrf.mxu0
    %723 = vmatprep.mubr.f32.mxu0 0.0
    %724 = vmatmul.mubr.f32.gmra.mxu0 %v136
    %v725 = vpop.f32.mrf.mxu0
    %v726 = vadd.f32 %v192, %v725
    %v727 = vpop.f32.mrf.mxu0
    %728 = vmatprep.mubr.f32.mxu0 0.0
    %729 = vmatmul.mubr.f32.gmra.mxu0 %v137
    %v730 = vpop.f32.mrf.mxu0
    %v731 = vadd.f32 %v192, %v730
    %v732 = vpop.f32.mrf.mxu0
    %733 = vmatprep.mubr.f32.mxu0 0.0
    %734 = vmatmul.mubr.f32.gmra.mxu0 %v138
    %v735 = vpop.f32.mrf.mxu0
    %v736 = vadd.f32 %v192, %v735
    %v737 = vpop.f32.mrf.mxu0
    %738 = vmatprep.mubr.f32.mxu0 0.0
    %739 = vmatmul.mubr.f32.gmra.mxu0 %v139
    %v740 = vpop.f32.mrf.mxu0
    %v741 = vadd.f32 %v192, %v740
    %v742 = vpop.f32.mrf.mxu0
    %743 = vmatprep.mubr.f32.mxu0 0.0
    %744 = vmatmul.mubr.f32.gmra.mxu0 %v140
    %v745 = vpop.f32.mrf.mxu0
    %v746 = vadd.f32 %v192, %v745
    %v747 = vpop.f32.mrf.mxu0
    %748 = vmatprep.mubr.f32.mxu0 0.0
    %749 = vmatmul.mubr.f32.gmra.mxu0 %v141
    %v750 = vpop.f32.mrf.mxu0
    %v751 = vadd.f32 %v192, %v750
    %v752 = vpop.f32.mrf.mxu0
    %753 = vmatprep.mubr.f32.mxu0 0.0
    %754 = vmatmul.mubr.f32.gmra.mxu0 %v142
    %v755 = vpop.f32.mrf.mxu0
    %v756 = vadd.f32 %v192, %v755
    %v757 = vpop.f32.mrf.mxu0
    %758 = vmatprep.mubr.f32.mxu0 0.0
    %759 = vmatmul.mubr.f32.gmra.mxu0 %v143
    %v760 = vpop.f32.mrf.mxu0
    %v761 = vadd.f32 %v192, %v760
    %v762 = vpop.f32.mrf.mxu0
    %763 = vmatprep.mubr.f32.mxu0 0.0
    %764 = vmatmul.mubr.f32.gmra.mxu0 %v144
    %v765 = vpop.f32.mrf.mxu0
    %v766 = vadd.f32 %v192, %v765
    %v767 = vpop.f32.mrf.mxu0
    %768 = vmatprep.mubr.f32.mxu0 0.0
    %769 = vmatmul.mubr.f32.gmra.mxu0 %v145
    %v770 = vpop.f32.mrf.mxu0
    %v771 = vadd.f32 %v192, %v770
    %v772 = vpop.f32.mrf.mxu0
    %773 = vmatprep.mubr.f32.mxu0 0.0
    %774 = vmatmul.mubr.f32.gmra.mxu0 %v146
    %v775 = vpop.f32.mrf.mxu0
    %v776 = vadd.f32 %v192, %v775
    %v777 = vpop.f32.mrf.mxu0
    %778 = vmatprep.mubr.f32.mxu0 0.0
    %779 = vmatmul.mubr.f32.gmra.mxu0 %v147
    %v780 = vpop.f32.mrf.mxu0
    %v781 = vadd.f32 %v192, %v780
    %v782 = vpop.f32.mrf.mxu0
    %783 = vmatprep.mubr.f32.mxu0 0.0
    %784 = vmatmul.mubr.f32.gmra.mxu0 %v148
    %v785 = vpop.f32.mrf.mxu0
    %v786 = vadd.f32 %v192, %v785
    %v787 = vpop.f32.mrf.mxu0
    %788 = vmatprep.mubr.f32.mxu0 0.0
    %789 = vmatmul.mubr.f32.gmra.mxu0 %v149
    %v790 = vpop.f32.mrf.mxu0
    %v791 = vadd.f32 %v192, %v790
    %v792 = vpop.f32.mrf.mxu0
    %793 = vmatprep.mubr.f32.mxu0 0.0
    %794 = vmatmul.mubr.f32.gmra.mxu0 %v150
    %v795 = vpop.f32.mrf.mxu0
    %v796 = vadd.f32 %v192, %v795
    %v797 = vpop.f32.mrf.mxu0
    %798 = vmatprep.mubr.f32.mxu0 0.0
    %799 = vmatmul.mubr.f32.gmra.mxu0 %v151
    %v800 = vpop.f32.mrf.mxu0
    %v801 = vadd.f32 %v192, %v800
    %v802 = vpop.f32.mrf.mxu0
    %803 = vmatprep.mubr.f32.mxu0 0.0
    %804 = vmatmul.mubr.f32.gmra.mxu0 %v152
    %v805 = vpop.f32.mrf.mxu0
    %v806 = vadd.f32 %v192, %v805
    %v807 = vpop.f32.mrf.mxu0
    %808 = vmatprep.mubr.f32.mxu0 0.0
    %809 = vmatmul.mubr.f32.gmra.mxu0 %v153
    %v810 = vpop.f32.mrf.mxu0
    %v811 = vadd.f32 %v192, %v810
    %v812 = vpop.f32.mrf.mxu0
    %813 = vmatprep.mubr.f32.mxu0 0.0
    %814 = vmatmul.mubr.f32.gmra.mxu0 %v154
    %v815 = vpop.f32.mrf.mxu0
    %v816 = vadd.f32 %v192, %v815
    %v817 = vpop.f32.mrf.mxu0
    %818 = vmatprep.mubr.f32.mxu0 0.0
    %819 = vmatmul.mubr.f32.gmra.mxu0 %v155
    %v820 = vpop.f32.mrf.mxu0
    %v821 = vadd.f32 %v192, %v820
    %v822 = vpop.f32.mrf.mxu0
    %823 = vmatprep.mubr.f32.mxu0 0.0
    %824 = vmatmul.mubr.f32.gmra.mxu0 %v156
    %v825 = vpop.f32.mrf.mxu0
    %v826 = vadd.f32 %v192, %v825
    %v827 = vpop.f32.mrf.mxu0
    %828 = vmatprep.mubr.f32.mxu0 0.0
    %829 = vmatmul.mubr.f32.gmra.mxu0 %v157
    %v830 = vpop.f32.mrf.mxu0
    %v831 = vadd.f32 %v192, %v830
    %v832 = vpop.f32.mrf.mxu0
    %833 = vmatprep.mubr.f32.mxu0 0.0
    %834 = vmatmul.mubr.f32.gmra.mxu0 %v158
    %v835 = vpop.f32.mrf.mxu0
    %v836 = vadd.f32 %v192, %v835
    %v837 = vpop.f32.mrf.mxu0
    %838 = vmatprep.mubr.f32.mxu0 0.0
    %839 = vmatmul.mubr.f32.gmra.mxu0 %v159
    %v840 = vpop.f32.mrf.mxu0
    %v841 = vadd.f32 %v192, %v840
    %v842 = vpop.f32.mrf.mxu0
    %843 = vmatprep.mubr.f32.mxu0 0.0
    %844 = vmatmul.mubr.f32.gmra.mxu0 %v160
    %v845 = vpop.f32.mrf.mxu0
    %v846 = vadd.f32 %v192, %v845
    %v847 = vpop.f32.mrf.mxu0
    %848 = vmatprep.mubr.f32.mxu0 0.0
    %849 = vmatmul.mubr.f32.gmra.mxu0 %v161
    %v850 = vpop.f32.mrf.mxu0
    %v851 = vadd.f32 %v192, %v850
    %v852 = vpop.f32.mrf.mxu0
    %853 = vmatprep.mubr.f32.mxu0 0.0
    %854 = vmatmul.mubr.f32.gmra.mxu0 %v162
    %v855 = vpop.f32.mrf.mxu0
    %v856 = vadd.f32 %v192, %v855
    %v857 = vpop.f32.mrf.mxu0
    %858 = vmatprep.mubr.f32.mxu0 0.0
    %859 = vmatmul.mubr.f32.gmra.mxu0 %v163
    %v860 = vpop.f32.mrf.mxu0
    %v861 = vadd.f32 %v192, %v860
    %v862 = vpop.f32.mrf.mxu0
    %863 = vmatprep.mubr.f32.mxu0 0.0
    %864 = vmatmul.mubr.f32.gmra.mxu0 %v164
    %v865 = vpop.f32.mrf.mxu0
    %v866 = vadd.f32 %v192, %v865
    %v867 = vpop.f32.mrf.mxu0
    %868 = vmatprep.mubr.f32.mxu0 0.0
    %869 = vmatmul.mubr.f32.gmra.mxu0 %v165
    %v870 = vpop.f32.mrf.mxu0
    %v871 = vadd.f32 %v192, %v870
    %v872 = vpop.f32.mrf.mxu0
    %873 = vmatprep.mubr.f32.mxu0 0.0
    %874 = vmatmul.mubr.f32.gmra.mxu0 %v166
    %v875 = vpop.f32.mrf.mxu0
    %v876 = vadd.f32 %v192, %v875
    %v877 = vpop.f32.mrf.mxu0
    %878 = vmatprep.mubr.f32.mxu0 0.0
    %879 = vmatmul.mubr.f32.gmra.mxu0 %v167
    %v880 = vpop.f32.mrf.mxu0
    %v881 = vadd.f32 %v192, %v880
    %v882 = vpop.f32.mrf.mxu0
    %883 = vmatprep.mubr.f32.mxu0 0.0
    %884 = vmatmul.mubr.f32.gmra.mxu0 %v168
    %v885 = vpop.f32.mrf.mxu0
    %v886 = vadd.f32 %v192, %v885
    %v887 = vpop.f32.mrf.mxu0
    %888 = vmatprep.mubr.f32.mxu0 0.0
    %889 = vmatmul.mubr.f32.gmra.mxu0 %v169
    %v890 = vpop.f32.mrf.mxu0
    %v891 = vadd.f32 %v192, %v890
    %v892 = vpop.f32.mrf.mxu0
    %893 = vmatprep.mubr.f32.mxu0 0.0
    %894 = vmatmul.mubr.f32.gmra.mxu0 %v170
    %v895 = vpop.f32.mrf.mxu0
    %v896 = vadd.f32 %v192, %v895
    %v897 = vpop.f32.mrf.mxu0
    %898 = vdwg.mxu0
    %v899 = vmul.f32 %v261, %v261
    %v900 = vmul.f32 %v266, %v266
    %v901 = vmul.f32 %v271, %v271
    %v902 = vmul.f32 %v276, %v276
    %v903 = vmul.f32 %v281, %v281
    %v904 = vmul.f32 %v286, %v286
    %v905 = vmul.f32 %v291, %v291
    %v906 = vmul.f32 %v296, %v296
    %v907 = vmul.f32 %v301, %v301
    %v908 = vmul.f32 %v306, %v306
    %v909 = vmul.f32 %v311, %v311
    %v910 = vmul.f32 %v316, %v316
    %v911 = vmul.f32 %v321, %v321
    %v912 = vmul.f32 %v326, %v326
    %v913 = vmul.f32 %v331, %v331
    %v914 = vmul.f32 %v336, %v336
    %v915 = vmul.f32 %v341, %v341
    %v916 = vmul.f32 %v346, %v346
    %v917 = vmul.f32 %v351, %v351
    %v918 = vmul.f32 %v356, %v356
    %v919 = vmul.f32 %v361, %v361
    %v920 = vmul.f32 %v366, %v366
    %v921 = vmul.f32 %v371, %v371
    %v922 = vmul.f32 %v376, %v376
    %v923 = vmul.f32 %v381, %v381
    %v924 = vmul.f32 %v386, %v386
    %v925 = vmul.f32 %v391, %v391
    %v926 = vmul.f32 %v396, %v396
    %v927 = vmul.f32 %v401, %v401
    %v928 = vmul.f32 %v406, %v406
    %v929 = vmul.f32 %v411, %v411
    %v930 = vmul.f32 %v416, %v416
    %v931 = vmul.f32 %v421, %v421
    %v932 = vmul.f32 %v426, %v426
    %v933 = vmul.f32 %v431, %v431
    %v934 = vmul.f32 %v436, %v436
    %v935 = vmul.f32 %v441, %v441
    %v936 = vmul.f32 %v446, %v446
    %v937 = vmul.f32 %v451, %v451
    %v938 = vmul.f32 %v456, %v456
    %v939 = vmul.f32 %v461, %v461
    %v940 = vmul.f32 %v466, %v466
    %v941 = vmul.f32 %v471, %v471
    %v942 = vmul.f32 %v476, %v476
    %v943 = vmul.f32 %v481, %v481
    %v944 = vmul.f32 %v486, %v486
    %v945 = vmul.f32 %v491, %v491
    %v946 = vmul.f32 %v496, %v496
    %v947 = vmul.f32 %v501, %v501
    %v948 = vmul.f32 %v506, %v506
    %v949 = vmul.f32 %v511, %v511
    %v950 = vmul.f32 %v516, %v516
    %v951 = vmul.f32 %v521, %v521
    %v952 = vmul.f32 %v526, %v526
    %v953 = vmul.f32 %v531, %v531
    %v954 = vmul.f32 %v536, %v536
    %v955 = vmul.f32 %v541, %v541
    %v956 = vmul.f32 %v546, %v546
    %v957 = vmul.f32 %v551, %v551
    %v958 = vmul.f32 %v556, %v556
    %v959 = vmul.f32 %v561, %v561
    %v960 = vmul.f32 %v566, %v566
    %v961 = vmul.f32 %v571, %v571
    %v962 = vmul.f32 %v576, %v576
    %v963 = vmul.f32 %v581, %v581
    %v964 = vmul.f32 %v586, %v586
    %v965 = vmul.f32 %v591, %v591
    %v966 = vmul.f32 %v596, %v596
    %v967 = vmul.f32 %v601, %v601
    %v968 = vmul.f32 %v606, %v606
    %v969 = vmul.f32 %v611, %v611
    %v970 = vmul.f32 %v616, %v616
    %v971 = vmul.f32 %v621, %v621
    %v972 = vmul.f32 %v626, %v626
    %v973 = vmul.f32 %v631, %v631
    %v974 = vmul.f32 %v636, %v636
    %v975 = vmul.f32 %v641, %v641
    %v976 = vmul.f32 %v646, %v646
    %v977 = vmul.f32 %v651, %v651
    %v978 = vmul.f32 %v656, %v656
    %v979 = vmul.f32 %v661, %v661
    %v980 = vmul.f32 %v666, %v666
    %v981 = vmul.f32 %v671, %v671
    %v982 = vmul.f32 %v676, %v676
    %v983 = vmul.f32 %v681, %v681
    %v984 = vmul.f32 %v686, %v686
    %v985 = vmul.f32 %v691, %v691
    %v986 = vmul.f32 %v696, %v696
    %v987 = vmul.f32 %v701, %v701
    %v988 = vmul.f32 %v706, %v706
    %v989 = vmul.f32 %v711, %v711
    %v990 = vmul.f32 %v716, %v716
    %v991 = vmul.f32 %v721, %v721
    %v992 = vmul.f32 %v726, %v726
    %v993 = vmul.f32 %v731, %v731
    %v994 = vmul.f32 %v736, %v736
    %v995 = vmul.f32 %v741, %v741
    %v996 = vmul.f32 %v746, %v746
    %v997 = vmul.f32 %v751, %v751
    %v998 = vmul.f32 %v756, %v756
    %v999 = vmul.f32 %v761, %v761
    %v1000 = vmul.f32 %v766, %v766
    %v1001 = vmul.f32 %v771, %v771
    %v1002 = vmul.f32 %v776, %v776
    %v1003 = vmul.f32 %v781, %v781
    %v1004 = vmul.f32 %v786, %v786
    %v1005 = vmul.f32 %v791, %v791
    %v1006 = vmul.f32 %v796, %v796
    %v1007 = vmul.f32 %v801, %v801
    %v1008 = vmul.f32 %v806, %v806
    %v1009 = vmul.f32 %v811, %v811
    %v1010 = vmul.f32 %v816, %v816
    %v1011 = vmul.f32 %v821, %v821
    %v1012 = vmul.f32 %v826, %v826
    %v1013 = vmul.f32 %v831, %v831
    %v1014 = vmul.f32 %v836, %v836
    %v1015 = vmul.f32 %v841, %v841
    %v1016 = vmul.f32 %v846, %v846
    %v1017 = vmul.f32 %v851, %v851
    %v1018 = vmul.f32 %v856, %v856
    %v1019 = vmul.f32 %v861, %v861
    %v1020 = vmul.f32 %v866, %v866
    %v1021 = vmul.f32 %v871, %v871
    %v1022 = vmul.f32 %v876, %v876
    %v1023 = vmul.f32 %v881, %v881
    %v1024 = vmul.f32 %v886, %v886
    %v1025 = vmul.f32 %v891, %v891
    %v1026 = vmul.f32 %v896, %v896
    %1027 = vadd.xlane.f32.xlu0 %v899
    %v1028 = vpop.xlane.xlu0 %1027
    %1029 = vadd.xlane.f32.xlu0 %v900
    %v1030 = vpop.xlane.xlu0 %1029
    %1031 = vadd.xlane.f32.xlu0 %v901
    %v1032 = vpop.xlane.xlu0 %1031
    %1033 = vadd.xlane.f32.xlu0 %v902
    %v1034 = vpop.xlane.xlu0 %1033
    %1035 = vadd.xlane.f32.xlu0 %v903
    %v1036 = vpop.xlane.xlu0 %1035
    %1037 = vadd.xlane.f32.xlu0 %v904
    %v1038 = vpop.xlane.xlu0 %1037
    %1039 = vadd.xlane.f32.xlu0 %v905
    %v1040 = vpop.xlane.xlu0 %1039
    %1041 = vadd.xlane.f32.xlu0 %v906
    %v1042 = vpop.xlane.xlu0 %1041
    %1043 = vadd.xlane.f32.xlu0 %v907
    %v1044 = vpop.xlane.xlu0 %1043
    %1045 = vadd.xlane.f32.xlu0 %v908
    %v1046 = vpop.xlane.xlu0 %1045
    %1047 = vadd.xlane.f32.xlu0 %v909
    %v1048 = vpop.xlane.xlu0 %1047
    %1049 = vadd.xlane.f32.xlu0 %v910
    %v1050 = vpop.xlane.xlu0 %1049
    %1051 = vadd.xlane.f32.xlu0 %v911
    %v1052 = vpop.xlane.xlu0 %1051
    %1053 = vadd.xlane.f32.xlu0 %v912
    %v1054 = vpop.xlane.xlu0 %1053
    %1055 = vadd.xlane.f32.xlu0 %v913
    %v1056 = vpop.xlane.xlu0 %1055
    %1057 = vadd.xlane.f32.xlu0 %v914
    %v1058 = vpop.xlane.xlu0 %1057
    %1059 = vadd.xlane.f32.xlu0 %v915
    %v1060 = vpop.xlane.xlu0 %1059
    %1061 = vadd.xlane.f32.xlu0 %v916
    %v1062 = vpop.xlane.xlu0 %1061
    %1063 = vadd.xlane.f32.xlu0 %v917
    %v1064 = vpop.xlane.xlu0 %1063
    %1065 = vadd.xlane.f32.xlu0 %v918
    %v1066 = vpop.xlane.xlu0 %1065
    %1067 = vadd.xlane.f32.xlu0 %v919
    %v1068 = vpop.xlane.xlu0 %1067
    %1069 = vadd.xlane.f32.xlu0 %v920
    %v1070 = vpop.xlane.xlu0 %1069
    %1071 = vadd.xlane.f32.xlu0 %v921
    %v1072 = vpop.xlane.xlu0 %1071
    %1073 = vadd.xlane.f32.xlu0 %v922
    %v1074 = vpop.xlane.xlu0 %1073
    %1075 = vadd.xlane.f32.xlu0 %v923
    %v1076 = vpop.xlane.xlu0 %1075
    %1077 = vadd.xlane.f32.xlu0 %v924
    %v1078 = vpop.xlane.xlu0 %1077
    %1079 = vadd.xlane.f32.xlu0 %v925
    %v1080 = vpop.xlane.xlu0 %1079
    %1081 = vadd.xlane.f32.xlu0 %v926
    %v1082 = vpop.xlane.xlu0 %1081
    %1083 = vadd.xlane.f32.xlu0 %v927
    %v1084 = vpop.xlane.xlu0 %1083
    %1085 = vadd.xlane.f32.xlu0 %v928
    %v1086 = vpop.xlane.xlu0 %1085
    %1087 = vadd.xlane.f32.xlu0 %v929
    %v1088 = vpop.xlane.xlu0 %1087
    %1089 = vadd.xlane.f32.xlu0 %v930
    %v1090 = vpop.xlane.xlu0 %1089
    %1091 = vadd.xlane.f32.xlu0 %v931
    %v1092 = vpop.xlane.xlu0 %1091
    %1093 = vadd.xlane.f32.xlu0 %v932
    %v1094 = vpop.xlane.xlu0 %1093
    %1095 = vadd.xlane.f32.xlu0 %v933
    %v1096 = vpop.xlane.xlu0 %1095
    %1097 = vadd.xlane.f32.xlu0 %v934
    %v1098 = vpop.xlane.xlu0 %1097
    %1099 = vadd.xlane.f32.xlu0 %v935
    %v1100 = vpop.xlane.xlu0 %1099
    %1101 = vadd.xlane.f32.xlu0 %v936
    %v1102 = vpop.xlane.xlu0 %1101
    %1103 = vadd.xlane.f32.xlu0 %v937
    %v1104 = vpop.xlane.xlu0 %1103
    %1105 = vadd.xlane.f32.xlu0 %v938
    %v1106 = vpop.xlane.xlu0 %1105
    %1107 = vadd.xlane.f32.xlu0 %v939
    %v1108 = vpop.xlane.xlu0 %1107
    %1109 = vadd.xlane.f32.xlu0 %v940
    %v1110 = vpop.xlane.xlu0 %1109
    %1111 = vadd.xlane.f32.xlu0 %v941
    %v1112 = vpop.xlane.xlu0 %1111
    %1113 = vadd.xlane.f32.xlu0 %v942
    %v1114 = vpop.xlane.xlu0 %1113
    %1115 = vadd.xlane.f32.xlu0 %v943
    %v1116 = vpop.xlane.xlu0 %1115
    %1117 = vadd.xlane.f32.xlu0 %v944
    %v1118 = vpop.xlane.xlu0 %1117
    %1119 = vadd.xlane.f32.xlu0 %v945
    %v1120 = vpop.xlane.xlu0 %1119
    %1121 = vadd.xlane.f32.xlu0 %v946
    %v1122 = vpop.xlane.xlu0 %1121
    %1123 = vadd.xlane.f32.xlu0 %v947
    %v1124 = vpop.xlane.xlu0 %1123
    %1125 = vadd.xlane.f32.xlu0 %v948
    %v1126 = vpop.xlane.xlu0 %1125
    %1127 = vadd.xlane.f32.xlu0 %v949
    %v1128 = vpop.xlane.xlu0 %1127
    %1129 = vadd.xlane.f32.xlu0 %v950
    %v1130 = vpop.xlane.xlu0 %1129
    %1131 = vadd.xlane.f32.xlu0 %v951
    %v1132 = vpop.xlane.xlu0 %1131
    %1133 = vadd.xlane.f32.xlu0 %v952
    %v1134 = vpop.xlane.xlu0 %1133
    %1135 = vadd.xlane.f32.xlu0 %v953
    %v1136 = vpop.xlane.xlu0 %1135
    %1137 = vadd.xlane.f32.xlu0 %v954
    %v1138 = vpop.xlane.xlu0 %1137
    %1139 = vadd.xlane.f32.xlu0 %v955
    %v1140 = vpop.xlane.xlu0 %1139
    %1141 = vadd.xlane.f32.xlu0 %v956
    %v1142 = vpop.xlane.xlu0 %1141
    %1143 = vadd.xlane.f32.xlu0 %v957
    %v1144 = vpop.xlane.xlu0 %1143
    %1145 = vadd.xlane.f32.xlu0 %v958
    %v1146 = vpop.xlane.xlu0 %1145
    %1147 = vadd.xlane.f32.xlu0 %v959
    %v1148 = vpop.xlane.xlu0 %1147
    %1149 = vadd.xlane.f32.xlu0 %v960
    %v1150 = vpop.xlane.xlu0 %1149
    %1151 = vadd.xlane.f32.xlu0 %v961
    %v1152 = vpop.xlane.xlu0 %1151
    %1153 = vadd.xlane.f32.xlu0 %v962
    %v1154 = vpop.xlane.xlu0 %1153
    %1155 = vadd.xlane.f32.xlu0 %v963
    %v1156 = vpop.xlane.xlu0 %1155
    %1157 = vadd.xlane.f32.xlu0 %v964
    %v1158 = vpop.xlane.xlu0 %1157
    %1159 = vadd.xlane.f32.xlu0 %v965
    %v1160 = vpop.xlane.xlu0 %1159
    %1161 = vadd.xlane.f32.xlu0 %v966
    %v1162 = vpop.xlane.xlu0 %1161
    %1163 = vadd.xlane.f32.xlu0 %v967
    %v1164 = vpop.xlane.xlu0 %1163
    %1165 = vadd.xlane.f32.xlu0 %v968
    %v1166 = vpop.xlane.xlu0 %1165
    %1167 = vadd.xlane.f32.xlu0 %v969
    %v1168 = vpop.xlane.xlu0 %1167
    %1169 = vadd.xlane.f32.xlu0 %v970
    %v1170 = vpop.xlane.xlu0 %1169
    %1171 = vadd.xlane.f32.xlu0 %v971
    %v1172 = vpop.xlane.xlu0 %1171
    %1173 = vadd.xlane.f32.xlu0 %v972
    %v1174 = vpop.xlane.xlu0 %1173
    %1175 = vadd.xlane.f32.xlu0 %v973
    %v1176 = vpop.xlane.xlu0 %1175
    %1177 = vadd.xlane.f32.xlu0 %v974
    %v1178 = vpop.xlane.xlu0 %1177
    %1179 = vadd.xlane.f32.xlu0 %v975
    %v1180 = vpop.xlane.xlu0 %1179
    %1181 = vadd.xlane.f32.xlu0 %v976
    %v1182 = vpop.xlane.xlu0 %1181
    %1183 = vadd.xlane.f32.xlu0 %v977
    %v1184 = vpop.xlane.xlu0 %1183
    %1185 = vadd.xlane.f32.xlu0 %v978
    %v1186 = vpop.xlane.xlu0 %1185
    %1187 = vadd.xlane.f32.xlu0 %v979
    %v1188 = vpop.xlane.xlu0 %1187
    %1189 = vadd.xlane.f32.xlu0 %v980
    %v1190 = vpop.xlane.xlu0 %1189
    %1191 = vadd.xlane.f32.xlu0 %v981
    %v1192 = vpop.xlane.xlu0 %1191
    %1193 = vadd.xlane.f32.xlu0 %v982
    %v1194 = vpop.xlane.xlu0 %1193
    %1195 = vadd.xlane.f32.xlu0 %v983
    %v1196 = vpop.xlane.xlu0 %1195
    %1197 = vadd.xlane.f32.xlu0 %v984
    %v1198 = vpop.xlane.xlu0 %1197
    %1199 = vadd.xlane.f32.xlu0 %v985
    %v1200 = vpop.xlane.xlu0 %1199
    %1201 = vadd.xlane.f32.xlu0 %v986
    %v1202 = vpop.xlane.xlu0 %1201
    %1203 = vadd.xlane.f32.xlu0 %v987
    %v1204 = vpop.xlane.xlu0 %1203
    %1205 = vadd.xlane.f32.xlu0 %v988
    %v1206 = vpop.xlane.xlu0 %1205
    %1207 = vadd.xlane.f32.xlu0 %v989
    %v1208 = vpop.xlane.xlu0 %1207
    %1209 = vadd.xlane.f32.xlu0 %v990
    %v1210 = vpop.xlane.xlu0 %1209
    %1211 = vadd.xlane.f32.xlu0 %v991
    %v1212 = vpop.xlane.xlu0 %1211
    %1213 = vadd.xlane.f32.xlu0 %v992
    %v1214 = vpop.xlane.xlu0 %1213
    %1215 = vadd.xlane.f32.xlu0 %v993
    %v1216 = vpop.xlane.xlu0 %1215
    %1217 = vadd.xlane.f32.xlu0 %v994
    %v1218 = vpop.xlane.xlu0 %1217
    %1219 = vadd.xlane.f32.xlu0 %v995
    %v1220 = vpop.xlane.xlu0 %1219
    %1221 = vadd.xlane.f32.xlu0 %v996
    %v1222 = vpop.xlane.xlu0 %1221
    %1223 = vadd.xlane.f32.xlu0 %v997
    %v1224 = vpop.xlane.xlu0 %1223
    %1225 = vadd.xlane.f32.xlu0 %v998
    %v1226 = vpop.xlane.xlu0 %1225
    %1227 = vadd.xlane.f32.xlu0 %v999
    %v1228 = vpop.xlane.xlu0 %1227
    %1229 = vadd.xlane.f32.xlu0 %v1000
    %v1230 = vpop.xlane.xlu0 %1229
    %1231 = vadd.xlane.f32.xlu0 %v1001
    %v1232 = vpop.xlane.xlu0 %1231
    %1233 = vadd.xlane.f32.xlu0 %v1002
    %v1234 = vpop.xlane.xlu0 %1233
    %1235 = vadd.xlane.f32.xlu0 %v1003
    %v1236 = vpop.xlane.xlu0 %1235
    %1237 = vadd.xlane.f32.xlu0 %v1004
    %v1238 = vpop.xlane.xlu0 %1237
    %1239 = vadd.xlane.f32.xlu0 %v1005
    %v1240 = vpop.xlane.xlu0 %1239
    %1241 = vadd.xlane.f32.xlu0 %v1006
    %v1242 = vpop.xlane.xlu0 %1241
    %1243 = vadd.xlane.f32.xlu0 %v1007
    %v1244 = vpop.xlane.xlu0 %1243
    %1245 = vadd.xlane.f32.xlu0 %v1008
    %v1246 = vpop.xlane.xlu0 %1245
    %1247 = vadd.xlane.f32.xlu0 %v1009
    %v1248 = vpop.xlane.xlu0 %1247
    %1249 = vadd.xlane.f32.xlu0 %v1010
    %v1250 = vpop.xlane.xlu0 %1249
    %1251 = vadd.xlane.f32.xlu0 %v1011
    %v1252 = vpop.xlane.xlu0 %1251
    %1253 = vadd.xlane.f32.xlu0 %v1012
    %v1254 = vpop.xlane.xlu0 %1253
    %1255 = vadd.xlane.f32.xlu0 %v1013
    %v1256 = vpop.xlane.xlu0 %1255
    %1257 = vadd.xlane.f32.xlu0 %v1014
    %v1258 = vpop.xlane.xlu0 %1257
    %1259 = vadd.xlane.f32.xlu0 %v1015
    %v1260 = vpop.xlane.xlu0 %1259
    %1261 = vadd.xlane.f32.xlu0 %v1016
    %v1262 = vpop.xlane.xlu0 %1261
    %1263 = vadd.xlane.f32.xlu0 %v1017
    %v1264 = vpop.xlane.xlu0 %1263
    %1265 = vadd.xlane.f32.xlu0 %v1018
    %v1266 = vpop.xlane.xlu0 %1265
    %1267 = vadd.xlane.f32.xlu0 %v1019
    %v1268 = vpop.xlane.xlu0 %1267
    %1269 = vadd.xlane.f32.xlu0 %v1020
    %v1270 = vpop.xlane.xlu0 %1269
    %1271 = vadd.xlane.f32.xlu0 %v1021
    %v1272 = vpop.xlane.xlu0 %1271
    %1273 = vadd.xlane.f32.xlu0 %v1022
    %v1274 = vpop.xlane.xlu0 %1273
    %1275 = vadd.xlane.f32.xlu0 %v1023
    %v1276 = vpop.xlane.xlu0 %1275
    %1277 = vadd.xlane.f32.xlu0 %v1024
    %v1278 = vpop.xlane.xlu0 %1277
    %1279 = vadd.xlane.f32.xlu0 %v1025
    %v1280 = vpop.xlane.xlu0 %1279
    %1281 = vadd.xlane.f32.xlu0 %v1026
    %v1282 = vpop.xlane.xlu0 %1281
    %v1283 = vmax.f32 %v1028, 1e-24
    %v1284 = vmax.f32 %v1030, 1e-24
    %v1285 = vmax.f32 %v1032, 1e-24
    %v1286 = vmax.f32 %v1034, 1e-24
    %v1287 = vmax.f32 %v1036, 1e-24
    %v1288 = vmax.f32 %v1038, 1e-24
    %v1289 = vmax.f32 %v1040, 1e-24
    %v1290 = vmax.f32 %v1042, 1e-24
    %v1291 = vmax.f32 %v1044, 1e-24
    %v1292 = vmax.f32 %v1046, 1e-24
    %v1293 = vmax.f32 %v1048, 1e-24
    %v1294 = vmax.f32 %v1050, 1e-24
    %v1295 = vmax.f32 %v1052, 1e-24
    %v1296 = vmax.f32 %v1054, 1e-24
    %v1297 = vmax.f32 %v1056, 1e-24
    %v1298 = vmax.f32 %v1058, 1e-24
    %v1299 = vmax.f32 %v1060, 1e-24
    %v1300 = vmax.f32 %v1062, 1e-24
    %v1301 = vmax.f32 %v1064, 1e-24
    %v1302 = vmax.f32 %v1066, 1e-24
    %v1303 = vmax.f32 %v1068, 1e-24
    %v1304 = vmax.f32 %v1070, 1e-24
    %v1305 = vmax.f32 %v1072, 1e-24
    %v1306 = vmax.f32 %v1074, 1e-24
    %v1307 = vmax.f32 %v1076, 1e-24
    %v1308 = vmax.f32 %v1078, 1e-24
    %v1309 = vmax.f32 %v1080, 1e-24
    %v1310 = vmax.f32 %v1082, 1e-24
    %v1311 = vmax.f32 %v1084, 1e-24
    %v1312 = vmax.f32 %v1086, 1e-24
    %v1313 = vmax.f32 %v1088, 1e-24
    %v1314 = vmax.f32 %v1090, 1e-24
    %v1315 = vmax.f32 %v1092, 1e-24
    %v1316 = vmax.f32 %v1094, 1e-24
    %v1317 = vmax.f32 %v1096, 1e-24
    %v1318 = vmax.f32 %v1098, 1e-24
    %v1319 = vmax.f32 %v1100, 1e-24
    %v1320 = vmax.f32 %v1102, 1e-24
    %v1321 = vmax.f32 %v1104, 1e-24
    %v1322 = vmax.f32 %v1106, 1e-24
    %v1323 = vmax.f32 %v1108, 1e-24
    %v1324 = vmax.f32 %v1110, 1e-24
    %v1325 = vmax.f32 %v1112, 1e-24
    %v1326 = vmax.f32 %v1114, 1e-24
    %v1327 = vmax.f32 %v1116, 1e-24
    %v1328 = vmax.f32 %v1118, 1e-24
    %v1329 = vmax.f32 %v1120, 1e-24
    %v1330 = vmax.f32 %v1122, 1e-24
    %v1331 = vmax.f32 %v1124, 1e-24
    %v1332 = vmax.f32 %v1126, 1e-24
    %v1333 = vmax.f32 %v1128, 1e-24
    %v1334 = vmax.f32 %v1130, 1e-24
    %v1335 = vmax.f32 %v1132, 1e-24
    %v1336 = vmax.f32 %v1134, 1e-24
    %v1337 = vmax.f32 %v1136, 1e-24
    %v1338 = vmax.f32 %v1138, 1e-24
    %v1339 = vmax.f32 %v1140, 1e-24
    %v1340 = vmax.f32 %v1142, 1e-24
    %v1341 = vmax.f32 %v1144, 1e-24
    %v1342 = vmax.f32 %v1146, 1e-24
    %v1343 = vmax.f32 %v1148, 1e-24
    %v1344 = vmax.f32 %v1150, 1e-24
    %v1345 = vmax.f32 %v1152, 1e-24
    %v1346 = vmax.f32 %v1154, 1e-24
    %v1347 = vmax.f32 %v1156, 1e-24
    %v1348 = vmax.f32 %v1158, 1e-24
    %v1349 = vmax.f32 %v1160, 1e-24
    %v1350 = vmax.f32 %v1162, 1e-24
    %v1351 = vmax.f32 %v1164, 1e-24
    %v1352 = vmax.f32 %v1166, 1e-24
    %v1353 = vmax.f32 %v1168, 1e-24
    %v1354 = vmax.f32 %v1170, 1e-24
    %v1355 = vmax.f32 %v1172, 1e-24
    %v1356 = vmax.f32 %v1174, 1e-24
    %v1357 = vmax.f32 %v1176, 1e-24
    %v1358 = vmax.f32 %v1178, 1e-24
    %v1359 = vmax.f32 %v1180, 1e-24
    %v1360 = vmax.f32 %v1182, 1e-24
    %v1361 = vmax.f32 %v1184, 1e-24
    %v1362 = vmax.f32 %v1186, 1e-24
    %v1363 = vmax.f32 %v1188, 1e-24
    %v1364 = vmax.f32 %v1190, 1e-24
    %v1365 = vmax.f32 %v1192, 1e-24
    %v1366 = vmax.f32 %v1194, 1e-24
    %v1367 = vmax.f32 %v1196, 1e-24
    %v1368 = vmax.f32 %v1198, 1e-24
    %v1369 = vmax.f32 %v1200, 1e-24
    %v1370 = vmax.f32 %v1202, 1e-24
    %v1371 = vmax.f32 %v1204, 1e-24
    %v1372 = vmax.f32 %v1206, 1e-24
    %v1373 = vmax.f32 %v1208, 1e-24
    %v1374 = vmax.f32 %v1210, 1e-24
    %v1375 = vmax.f32 %v1212, 1e-24
    %v1376 = vmax.f32 %v1214, 1e-24
    %v1377 = vmax.f32 %v1216, 1e-24
    %v1378 = vmax.f32 %v1218, 1e-24
    %v1379 = vmax.f32 %v1220, 1e-24
    %v1380 = vmax.f32 %v1222, 1e-24
    %v1381 = vmax.f32 %v1224, 1e-24
    %v1382 = vmax.f32 %v1226, 1e-24
    %v1383 = vmax.f32 %v1228, 1e-24
    %v1384 = vmax.f32 %v1230, 1e-24
    %v1385 = vmax.f32 %v1232, 1e-24
    %v1386 = vmax.f32 %v1234, 1e-24
    %v1387 = vmax.f32 %v1236, 1e-24
    %v1388 = vmax.f32 %v1238, 1e-24
    %v1389 = vmax.f32 %v1240, 1e-24
    %v1390 = vmax.f32 %v1242, 1e-24
    %v1391 = vmax.f32 %v1244, 1e-24
    %v1392 = vmax.f32 %v1246, 1e-24
    %v1393 = vmax.f32 %v1248, 1e-24
    %v1394 = vmax.f32 %v1250, 1e-24
    %v1395 = vmax.f32 %v1252, 1e-24
    %v1396 = vmax.f32 %v1254, 1e-24
    %v1397 = vmax.f32 %v1256, 1e-24
    %v1398 = vmax.f32 %v1258, 1e-24
    %v1399 = vmax.f32 %v1260, 1e-24
    %v1400 = vmax.f32 %v1262, 1e-24
    %v1401 = vmax.f32 %v1264, 1e-24
    %v1402 = vmax.f32 %v1266, 1e-24
    %v1403 = vmax.f32 %v1268, 1e-24
    %v1404 = vmax.f32 %v1270, 1e-24
    %v1405 = vmax.f32 %v1272, 1e-24
    %v1406 = vmax.f32 %v1274, 1e-24
    %v1407 = vmax.f32 %v1276, 1e-24
    %v1408 = vmax.f32 %v1278, 1e-24
    %v1409 = vmax.f32 %v1280, 1e-24
    %v1410 = vmax.f32 %v1282, 1e-24
    %v1411 = vrsqrt.pop %v1283
    %v1412 = vrsqrt.pop %v1284
    %v1413 = vrsqrt.pop %v1285
    %v1414 = vrsqrt.pop %v1286
    %v1415 = vrsqrt.pop %v1287
    %v1416 = vrsqrt.pop %v1288
    %v1417 = vrsqrt.pop %v1289
    %v1418 = vrsqrt.pop %v1290
    %v1419 = vrsqrt.pop %v1291
    %v1420 = vrsqrt.pop %v1292
    %v1421 = vrsqrt.pop %v1293
    %v1422 = vrsqrt.pop %v1294
    %v1423 = vrsqrt.pop %v1295
    %v1424 = vrsqrt.pop %v1296
    %v1425 = vrsqrt.pop %v1297
    %v1426 = vrsqrt.pop %v1298
    %v1427 = vrsqrt.pop %v1299
    %v1428 = vrsqrt.pop %v1300
    %v1429 = vrsqrt.pop %v1301
    %v1430 = vrsqrt.pop %v1302
    %v1431 = vrsqrt.pop %v1303
    %v1432 = vrsqrt.pop %v1304
    %v1433 = vrsqrt.pop %v1305
    %v1434 = vrsqrt.pop %v1306
    %v1435 = vrsqrt.pop %v1307
    %v1436 = vrsqrt.pop %v1308
    %v1437 = vrsqrt.pop %v1309
    %v1438 = vrsqrt.pop %v1310
    %v1439 = vrsqrt.pop %v1311
    %v1440 = vrsqrt.pop %v1312
    %v1441 = vrsqrt.pop %v1313
    %v1442 = vrsqrt.pop %v1314
    %v1443 = vrsqrt.pop %v1315
    %v1444 = vrsqrt.pop %v1316
    %v1445 = vrsqrt.pop %v1317
    %v1446 = vrsqrt.pop %v1318
    %v1447 = vrsqrt.pop %v1319
    %v1448 = vrsqrt.pop %v1320
    %v1449 = vrsqrt.pop %v1321
    %v1450 = vrsqrt.pop %v1322
    %v1451 = vrsqrt.pop %v1323
    %v1452 = vrsqrt.pop %v1324
    %v1453 = vrsqrt.pop %v1325
    %v1454 = vrsqrt.pop %v1326
    %v1455 = vrsqrt.pop %v1327
    %v1456 = vrsqrt.pop %v1328
    %v1457 = vrsqrt.pop %v1329
    %v1458 = vrsqrt.pop %v1330
    %v1459 = vrsqrt.pop %v1331
    %v1460 = vrsqrt.pop %v1332
    %v1461 = vrsqrt.pop %v1333
    %v1462 = vrsqrt.pop %v1334
    %v1463 = vrsqrt.pop %v1335
    %v1464 = vrsqrt.pop %v1336
    %v1465 = vrsqrt.pop %v1337
    %v1466 = vrsqrt.pop %v1338
    %v1467 = vrsqrt.pop %v1339
    %v1468 = vrsqrt.pop %v1340
    %v1469 = vrsqrt.pop %v1341
    %v1470 = vrsqrt.pop %v1342
    %v1471 = vrsqrt.pop %v1343
    %v1472 = vrsqrt.pop %v1344
    %v1473 = vrsqrt.pop %v1345
    %v1474 = vrsqrt.pop %v1346
    %v1475 = vrsqrt.pop %v1347
    %v1476 = vrsqrt.pop %v1348
    %v1477 = vrsqrt.pop %v1349
    %v1478 = vrsqrt.pop %v1350
    %v1479 = vrsqrt.pop %v1351
    %v1480 = vrsqrt.pop %v1352
    %v1481 = vrsqrt.pop %v1353
    %v1482 = vrsqrt.pop %v1354
    %v1483 = vrsqrt.pop %v1355
    %v1484 = vrsqrt.pop %v1356
    %v1485 = vrsqrt.pop %v1357
    %v1486 = vrsqrt.pop %v1358
    %v1487 = vrsqrt.pop %v1359
    %v1488 = vrsqrt.pop %v1360
    %v1489 = vrsqrt.pop %v1361
    %v1490 = vrsqrt.pop %v1362
    %v1491 = vrsqrt.pop %v1363
    %v1492 = vrsqrt.pop %v1364
    %v1493 = vrsqrt.pop %v1365
    %v1494 = vrsqrt.pop %v1366
    %v1495 = vrsqrt.pop %v1367
    %v1496 = vrsqrt.pop %v1368
    %v1497 = vrsqrt.pop %v1369
    %v1498 = vrsqrt.pop %v1370
    %v1499 = vrsqrt.pop %v1371
    %v1500 = vrsqrt.pop %v1372
    %v1501 = vrsqrt.pop %v1373
    %v1502 = vrsqrt.pop %v1374
    %v1503 = vrsqrt.pop %v1375
    %v1504 = vrsqrt.pop %v1376
    %v1505 = vrsqrt.pop %v1377
    %v1506 = vrsqrt.pop %v1378
    %v1507 = vrsqrt.pop %v1379
    %v1508 = vrsqrt.pop %v1380
    %v1509 = vrsqrt.pop %v1381
    %v1510 = vrsqrt.pop %v1382
    %v1511 = vrsqrt.pop %v1383
    %v1512 = vrsqrt.pop %v1384
    %v1513 = vrsqrt.pop %v1385
    %v1514 = vrsqrt.pop %v1386
    %v1515 = vrsqrt.pop %v1387
    %v1516 = vrsqrt.pop %v1388
    %v1517 = vrsqrt.pop %v1389
    %v1518 = vrsqrt.pop %v1390
    %v1519 = vrsqrt.pop %v1391
    %v1520 = vrsqrt.pop %v1392
    %v1521 = vrsqrt.pop %v1393
    %v1522 = vrsqrt.pop %v1394
    %v1523 = vrsqrt.pop %v1395
    %v1524 = vrsqrt.pop %v1396
    %v1525 = vrsqrt.pop %v1397
    %v1526 = vrsqrt.pop %v1398
    %v1527 = vrsqrt.pop %v1399
    %v1528 = vrsqrt.pop %v1400
    %v1529 = vrsqrt.pop %v1401
    %v1530 = vrsqrt.pop %v1402
    %v1531 = vrsqrt.pop %v1403
    %v1532 = vrsqrt.pop %v1404
    %v1533 = vrsqrt.pop %v1405
    %v1534 = vrsqrt.pop %v1406
    %v1535 = vrsqrt.pop %v1407
    %v1536 = vrsqrt.pop %v1408
    %v1537 = vrsqrt.pop %v1409
    %v1538 = vrsqrt.pop %v1410
    %v1539 = vmul.f32 %v261, %v1411
    %v1540 = vmul.f32 %v266, %v1412
    %v1541 = vmul.f32 %v271, %v1413
    %v1542 = vmul.f32 %v276, %v1414
    %v1543 = vmul.f32 %v281, %v1415
    %v1544 = vmul.f32 %v286, %v1416
    %v1545 = vmul.f32 %v291, %v1417
    %v1546 = vmul.f32 %v296, %v1418
    %v1547 = vmul.f32 %v301, %v1419
    %v1548 = vmul.f32 %v306, %v1420
    %v1549 = vmul.f32 %v311, %v1421
    %v1550 = vmul.f32 %v316, %v1422
    %v1551 = vmul.f32 %v321, %v1423
    %v1552 = vmul.f32 %v326, %v1424
    %v1553 = vmul.f32 %v331, %v1425
    %v1554 = vmul.f32 %v336, %v1426
    %v1555 = vmul.f32 %v341, %v1427
    %v1556 = vmul.f32 %v346, %v1428
    %v1557 = vmul.f32 %v351, %v1429
    %v1558 = vmul.f32 %v356, %v1430
    %v1559 = vmul.f32 %v361, %v1431
    %v1560 = vmul.f32 %v366, %v1432
    %v1561 = vmul.f32 %v371, %v1433
    %v1562 = vmul.f32 %v376, %v1434
    %v1563 = vmul.f32 %v381, %v1435
    %v1564 = vmul.f32 %v386, %v1436
    %v1565 = vmul.f32 %v391, %v1437
    %v1566 = vmul.f32 %v396, %v1438
    %v1567 = vmul.f32 %v401, %v1439
    %v1568 = vmul.f32 %v406, %v1440
    %v1569 = vmul.f32 %v411, %v1441
    %v1570 = vmul.f32 %v416, %v1442
    %v1571 = vmul.f32 %v421, %v1443
    %v1572 = vmul.f32 %v426, %v1444
    %v1573 = vmul.f32 %v431, %v1445
    %v1574 = vmul.f32 %v436, %v1446
    %v1575 = vmul.f32 %v441, %v1447
    %v1576 = vmul.f32 %v446, %v1448
    %v1577 = vmul.f32 %v451, %v1449
    %v1578 = vmul.f32 %v456, %v1450
    %v1579 = vmul.f32 %v461, %v1451
    %v1580 = vmul.f32 %v466, %v1452
    %v1581 = vmul.f32 %v471, %v1453
    %v1582 = vmul.f32 %v476, %v1454
    %v1583 = vmul.f32 %v481, %v1455
    %v1584 = vmul.f32 %v486, %v1456
    %v1585 = vmul.f32 %v491, %v1457
    %v1586 = vmul.f32 %v496, %v1458
    %v1587 = vmul.f32 %v501, %v1459
    %v1588 = vmul.f32 %v506, %v1460
    %v1589 = vmul.f32 %v511, %v1461
    %v1590 = vmul.f32 %v516, %v1462
    %v1591 = vmul.f32 %v521, %v1463
    %v1592 = vmul.f32 %v526, %v1464
    %v1593 = vmul.f32 %v531, %v1465
    %v1594 = vmul.f32 %v536, %v1466
    %v1595 = vmul.f32 %v541, %v1467
    %v1596 = vmul.f32 %v546, %v1468
    %v1597 = vmul.f32 %v551, %v1469
    %v1598 = vmul.f32 %v556, %v1470
    %v1599 = vmul.f32 %v561, %v1471
    %v1600 = vmul.f32 %v566, %v1472
    %v1601 = vmul.f32 %v571, %v1473
    %v1602 = vmul.f32 %v576, %v1474
    %v1603 = vmul.f32 %v581, %v1475
    %v1604 = vmul.f32 %v586, %v1476
    %v1605 = vmul.f32 %v591, %v1477
    %v1606 = vmul.f32 %v596, %v1478
    %v1607 = vmul.f32 %v601, %v1479
    %v1608 = vmul.f32 %v606, %v1480
    %v1609 = vmul.f32 %v611, %v1481
    %v1610 = vmul.f32 %v616, %v1482
    %v1611 = vmul.f32 %v621, %v1483
    %v1612 = vmul.f32 %v626, %v1484
    %v1613 = vmul.f32 %v631, %v1485
    %v1614 = vmul.f32 %v636, %v1486
    %v1615 = vmul.f32 %v641, %v1487
    %v1616 = vmul.f32 %v646, %v1488
    %v1617 = vmul.f32 %v651, %v1489
    %v1618 = vmul.f32 %v656, %v1490
    %v1619 = vmul.f32 %v661, %v1491
    %v1620 = vmul.f32 %v666, %v1492
    %v1621 = vmul.f32 %v671, %v1493
    %v1622 = vmul.f32 %v676, %v1494
    %v1623 = vmul.f32 %v681, %v1495
    %v1624 = vmul.f32 %v686, %v1496
    %v1625 = vmul.f32 %v691, %v1497
    %v1626 = vmul.f32 %v696, %v1498
    %v1627 = vmul.f32 %v701, %v1499
    %v1628 = vmul.f32 %v706, %v1500
    %v1629 = vmul.f32 %v711, %v1501
    %v1630 = vmul.f32 %v716, %v1502
    %v1631 = vmul.f32 %v721, %v1503
    %v1632 = vmul.f32 %v726, %v1504
    %v1633 = vmul.f32 %v731, %v1505
    %v1634 = vmul.f32 %v736, %v1506
    %v1635 = vmul.f32 %v741, %v1507
    %v1636 = vmul.f32 %v746, %v1508
    %v1637 = vmul.f32 %v751, %v1509
    %v1638 = vmul.f32 %v756, %v1510
    %v1639 = vmul.f32 %v761, %v1511
    %v1640 = vmul.f32 %v766, %v1512
    %v1641 = vmul.f32 %v771, %v1513
    %v1642 = vmul.f32 %v776, %v1514
    %v1643 = vmul.f32 %v781, %v1515
    %v1644 = vmul.f32 %v786, %v1516
    %v1645 = vmul.f32 %v791, %v1517
    %v1646 = vmul.f32 %v796, %v1518
    %v1647 = vmul.f32 %v801, %v1519
    %v1648 = vmul.f32 %v806, %v1520
    %v1649 = vmul.f32 %v811, %v1521
    %v1650 = vmul.f32 %v816, %v1522
    %v1651 = vmul.f32 %v821, %v1523
    %v1652 = vmul.f32 %v826, %v1524
    %v1653 = vmul.f32 %v831, %v1525
    %v1654 = vmul.f32 %v836, %v1526
    %v1655 = vmul.f32 %v841, %v1527
    %v1656 = vmul.f32 %v846, %v1528
    %v1657 = vmul.f32 %v851, %v1529
    %v1658 = vmul.f32 %v856, %v1530
    %v1659 = vmul.f32 %v861, %v1531
    %v1660 = vmul.f32 %v866, %v1532
    %v1661 = vmul.f32 %v871, %v1533
    %v1662 = vmul.f32 %v876, %v1534
    %v1663 = vmul.f32 %v881, %v1535
    %v1664 = vmul.f32 %v886, %v1536
    %v1665 = vmul.f32 %v891, %v1537
    %v1666 = vmul.f32 %v896, %v1538
    %1667 = vst [vmem:[#allocation7] sm:$0xff] %v1539
    %1668 = vst [vmem:[#allocation7 + $0x8] sm:$0xff] %v1540
    %1669 = vst [vmem:[#allocation7 + $0x10] sm:$0xff] %v1541
    %1670 = vst [vmem:[#allocation7 + $0x18] sm:$0xff] %v1542
    %1671 = vst [vmem:[#allocation7 + $0x20] sm:$0xff] %v1543
    %1672 = vst [vmem:[#allocation7 + $0x28] sm:$0xff] %v1544
    %1673 = vst [vmem:[#allocation7 + $0x30] sm:$0xff] %v1545
    %1674 = vst [vmem:[#allocation7 + $0x38] sm:$0xff] %v1546
    %1675 = vst [vmem:[#allocation7 + $0x40] sm:$0xff] %v1547
    %1676 = vst [vmem:[#allocation7 + $0x48] sm:$0xff] %v1548
    %1677 = vst [vmem:[#allocation7 + $0x50] sm:$0xff] %v1549
    %1678 = vst [vmem:[#allocation7 + $0x58] sm:$0xff] %v1550
    %1679 = vst [vmem:[#allocation7 + $0x60] sm:$0xff] %v1551
    %1680 = vst [vmem:[#allocation7 + $0x68] sm:$0xff] %v1552
    %1681 = vst [vmem:[#allocation7 + $0x70] sm:$0xff] %v1553
    %1682 = vst [vmem:[#allocation7 + $0x78] sm:$0xff] %v1554
    %1683 = vst [vmem:[#allocation7 + $0x80] sm:$0xff] %v1555
    %1684 = vst [vmem:[#allocation7 + $0x88] sm:$0xff] %v1556
    %1685 = vst [vmem:[#allocation7 + $0x90] sm:$0xff] %v1557
    %1686 = vst [vmem:[#allocation7 + $0x98] sm:$0xff] %v1558
    %1687 = vst [vmem:[#allocation7 + $0xa0] sm:$0xff] %v1559
    %1688 = vst [vmem:[#allocation7 + $0xa8] sm:$0xff] %v1560
    %1689 = vst [vmem:[#allocation7 + $0xb0] sm:$0xff] %v1561
    %1690 = vst [vmem:[#allocation7 + $0xb8] sm:$0xff] %v1562
    %1691 = vst [vmem:[#allocation7 + $0xc0] sm:$0xff] %v1563
    %1692 = vst [vmem:[#allocation7 + $0xc8] sm:$0xff] %v1564
    %1693 = vst [vmem:[#allocation7 + $0xd0] sm:$0xff] %v1565
    %1694 = vst [vmem:[#allocation7 + $0xd8] sm:$0xff] %v1566
    %1695 = vst [vmem:[#allocation7 + $0xe0] sm:$0xff] %v1567
    %1696 = vst [vmem:[#allocation7 + $0xe8] sm:$0xff] %v1568
    %1697 = vst [vmem:[#allocation7 + $0xf0] sm:$0xff] %v1569
    %1698 = vst [vmem:[#allocation7 + $0xf8] sm:$0xff] %v1570
    %1699 = vst [vmem:[#allocation7 + $0x100] sm:$0xff] %v1571
    %1700 = vst [vmem:[#allocation7 + $0x108] sm:$0xff] %v1572
    %1701 = vst [vmem:[#allocation7 + $0x110] sm:$0xff] %v1573
    %1702 = vst [vmem:[#allocation7 + $0x118] sm:$0xff] %v1574
    %1703 = vst [vmem:[#allocation7 + $0x120] sm:$0xff] %v1575
    %1704 = vst [vmem:[#allocation7 + $0x128] sm:$0xff] %v1576
    %1705 = vst [vmem:[#allocation7 + $0x130] sm:$0xff] %v1577
    %1706 = vst [vmem:[#allocation7 + $0x138] sm:$0xff] %v1578
    %1707 = vst [vmem:[#allocation7 + $0x140] sm:$0xff] %v1579
    %1708 = vst [vmem:[#allocation7 + $0x148] sm:$0xff] %v1580
    %1709 = vst [vmem:[#allocation7 + $0x150] sm:$0xff] %v1581
    %1710 = vst [vmem:[#allocation7 + $0x158] sm:$0xff] %v1582
    %1711 = vst [vmem:[#allocation7 + $0x160] sm:$0xff] %v1583
    %1712 = vst [vmem:[#allocation7 + $0x168] sm:$0xff] %v1584
    %1713 = vst [vmem:[#allocation7 + $0x170] sm:$0xff] %v1585
    %1714 = vst [vmem:[#allocation7 + $0x178] sm:$0xff] %v1586
    %1715 = vst [vmem:[#allocation7 + $0x180] sm:$0xff] %v1587
    %1716 = vst [vmem:[#allocation7 + $0x188] sm:$0xff] %v1588
    %1717 = vst [vmem:[#allocation7 + $0x190] sm:$0xff] %v1589
    %1718 = vst [vmem:[#allocation7 + $0x198] sm:$0xff] %v1590
    %1719 = vst [vmem:[#allocation7 + $0x1a0] sm:$0xff] %v1591
    %1720 = vst [vmem:[#allocation7 + $0x1a8] sm:$0xff] %v1592
    %1721 = vst [vmem:[#allocation7 + $0x1b0] sm:$0xff] %v1593
    %1722 = vst [vmem:[#allocation7 + $0x1b8] sm:$0xff] %v1594
    %1723 = vst [vmem:[#allocation7 + $0x1c0] sm:$0xff] %v1595
    %1724 = vst [vmem:[#allocation7 + $0x1c8] sm:$0xff] %v1596
    %1725 = vst [vmem:[#allocation7 + $0x1d0] sm:$0xff] %v1597
    %1726 = vst [vmem:[#allocation7 + $0x1d8] sm:$0xff] %v1598
    %1727 = vst [vmem:[#allocation7 + $0x1e0] sm:$0xff] %v1599
    %1728 = vst [vmem:[#allocation7 + $0x1e8] sm:$0xff] %v1600
    %1729 = vst [vmem:[#allocation7 + $0x1f0] sm:$0xff] %v1601
    %1730 = vst [vmem:[#allocation7 + $0x1f8] sm:$0xff] %v1602
    %1731 = vst [vmem:[#allocation7 + $0x200] sm:$0xff] %v1603
    %1732 = vst [vmem:[#allocation7 + $0x208] sm:$0xff] %v1604
    %1733 = vst [vmem:[#allocation7 + $0x210] sm:$0xff] %v1605
    %1734 = vst [vmem:[#allocation7 + $0x218] sm:$0xff] %v1606
    %1735 = vst [vmem:[#allocation7 + $0x220] sm:$0xff] %v1607
    %1736 = vst [vmem:[#allocation7 + $0x228] sm:$0xff] %v1608
    %1737 = vst [vmem:[#allocation7 + $0x230] sm:$0xff] %v1609
    %1738 = vst [vmem:[#allocation7 + $0x238] sm:$0xff] %v1610
    %1739 = vst [vmem:[#allocation7 + $0x240] sm:$0xff] %v1611
    %1740 = vst [vmem:[#allocation7 + $0x248] sm:$0xff] %v1612
    %1741 = vst [vmem:[#allocation7 + $0x250] sm:$0xff] %v1613
    %1742 = vst [vmem:[#allocation7 + $0x258] sm:$0xff] %v1614
    %1743 = vst [vmem:[#allocation7 + $0x260] sm:$0xff] %v1615
    %1744 = vst [vmem:[#allocation7 + $0x268] sm:$0xff] %v1616
    %1745 = vst [vmem:[#allocation7 + $0x270] sm:$0xff] %v1617
    %1746 = vst [vmem:[#allocation7 + $0x278] sm:$0xff] %v1618
    %1747 = vst [vmem:[#allocation7 + $0x280] sm:$0xff] %v1619
    %1748 = vst [vmem:[#allocation7 + $0x288] sm:$0xff] %v1620
    %1749 = vst [vmem:[#allocation7 + $0x290] sm:$0xff] %v1621
    %1750 = vst [vmem:[#allocation7 + $0x298] sm:$0xff] %v1622
    %1751 = vst [vmem:[#allocation7 + $0x2a0] sm:$0xff] %v1623
    %1752 = vst [vmem:[#allocation7 + $0x2a8] sm:$0xff] %v1624
    %1753 = vst [vmem:[#allocation7 + $0x2b0] sm:$0xff] %v1625
    %1754 = vst [vmem:[#allocation7 + $0x2b8] sm:$0xff] %v1626
    %1755 = vst [vmem:[#allocation7 + $0x2c0] sm:$0xff] %v1627
    %1756 = vst [vmem:[#allocation7 + $0x2c8] sm:$0xff] %v1628
    %1757 = vst [vmem:[#allocation7 + $0x2d0] sm:$0xff] %v1629
    %1758 = vst [vmem:[#allocation7 + $0x2d8] sm:$0xff] %v1630
    %1759 = vst [vmem:[#allocation7 + $0x2e0] sm:$0xff] %v1631
    %1760 = vst [vmem:[#allocation7 + $0x2e8] sm:$0xff] %v1632
    %1761 = vst [vmem:[#allocation7 + $0x2f0] sm:$0xff] %v1633
    %1762 = vst [vmem:[#allocation7 + $0x2f8] sm:$0xff] %v1634
    %1763 = vst [vmem:[#allocation7 + $0x300] sm:$0xff] %v1635
    %1764 = vst [vmem:[#allocation7 + $0x308] sm:$0xff] %v1636
    %1765 = vst [vmem:[#allocation7 + $0x310] sm:$0xff] %v1637
    %1766 = vst [vmem:[#allocation7 + $0x318] sm:$0xff] %v1638
    %1767 = vst [vmem:[#allocation7 + $0x320] sm:$0xff] %v1639
    %1768 = vst [vmem:[#allocation7 + $0x328] sm:$0xff] %v1640
    %1769 = vst [vmem:[#allocation7 + $0x330] sm:$0xff] %v1641
    %1770 = vst [vmem:[#allocation7 + $0x338] sm:$0xff] %v1642
    %1771 = vst [vmem:[#allocation7 + $0x340] sm:$0xff] %v1643
    %1772 = vst [vmem:[#allocation7 + $0x348] sm:$0xff] %v1644
    %1773 = vst [vmem:[#allocation7 + $0x350] sm:$0xff] %v1645
    %1774 = vst [vmem:[#allocation7 + $0x358] sm:$0xff] %v1646
    %1775 = vst [vmem:[#allocation7 + $0x360] sm:$0xff] %v1647
    %1776 = vst [vmem:[#allocation7 + $0x368] sm:$0xff] %v1648
    %1777 = vst [vmem:[#allocation7 + $0x370] sm:$0xff] %v1649
    %1778 = vst [vmem:[#allocation7 + $0x378] sm:$0xff] %v1650
    %1779 = vst [vmem:[#allocation7 + $0x380] sm:$0xff] %v1651
    %1780 = vst [vmem:[#allocation7 + $0x388] sm:$0xff] %v1652
    %1781 = vst [vmem:[#allocation7 + $0x390] sm:$0xff] %v1653
    %1782 = vst [vmem:[#allocation7 + $0x398] sm:$0xff] %v1654
    %1783 = vst [vmem:[#allocation7 + $0x3a0] sm:$0xff] %v1655
    %1784 = vst [vmem:[#allocation7 + $0x3a8] sm:$0xff] %v1656
    %1785 = vst [vmem:[#allocation7 + $0x3b0] sm:$0xff] %v1657
    %1786 = vst [vmem:[#allocation7 + $0x3b8] sm:$0xff] %v1658
    %1787 = vst [vmem:[#allocation7 + $0x3c0] sm:$0xff] %v1659
    %1788 = vst [vmem:[#allocation7 + $0x3c8] sm:$0xff] %v1660
    %1789 = vst [vmem:[#allocation7 + $0x3d0] sm:$0xff] %v1661
    %1790 = vst [vmem:[#allocation7 + $0x3d8] sm:$0xff] %v1662
    %1791 = vst [vmem:[#allocation7 + $0x3e0] sm:$0xff] %v1663
    %1792 = vst [vmem:[#allocation7 + $0x3e8] sm:$0xff] %v1664
    %1793 = vst [vmem:[#allocation7 + $0x3f0] sm:$0xff] %v1665
    %1794 = vst [vmem:[#allocation7 + $0x3f8] sm:$0xff] %v1666
    // Predicated region
    $region22: #{tpu_custom_call.1} parent=1 // pred_check
      _
    $region23: #{tpu_custom_call.1} parent=1 // pred_check_branch
      %1796 = sbr.rel (0) target = $region25
    $region24: #{tpu_custom_call.1} parent=1 // pred_region
      %s1798 = ssub.s32 16384, 16384
      %1799 = vsyncadd [#allocation4], %s1798
      %s1800 = sshll.u32 [#allocation7], 4
      %s1801 = int_to_ptr.vmem [resolvable:$true] %s1800
      %1806 = dma.vmem_to_hbm [thread:$0]  %s1801, 16384, %s3, [#allocation4], 128, 128, 8
    $region25: #{tpu_custom_call.1} parent=1 // pred_fallthru
      _
    // Predicated region
    $region26: #{tpu_custom_call.1} parent=1 // pred_check
      _
    $region27: #{tpu_custom_call.1} parent=1 // pred_check_branch
      %1808 = sbr.rel (0) target = $region29
    $region28: #{tpu_custom_call.1} parent=1 // pred_region
      %1809 = dma.done [#allocation4], 16384
    $region29: #{tpu_custom_call.1} parent=1 // pred_fallthru
      _
    %1810 = vsyncpa [#allocation3], 1
    %1811 = vsyncpa [#allocation6], 1
    %1812 = vsyncpa [#allocation4], 1

</llo_original>
